<compile_context>
chip_gen: v5e
topology: v5e:2x2
jax: 0.10.0
libtpu: 0.0.40
codegen_flags: <defaults>
</compile_context>

<pallas_src>
import math
import functools

import jax
import jax.numpy as jnp
from jax import lax
from jax.experimental import pallas as pl
from jax.experimental.pallas import tpu as pltpu


def _bert_attention_kernel(
    xq_ref,      # (1, TQ, H)   f32  query tile (residual / LayerNorm input)
    xf_ref,      # (1, S, H)    bf16 full sequence (K/V projection operand)
    mask_ref,    # (1, 1, 1, S) f32  additive attention mask
    wq_ref,      # (H, H)   bf16  query weight, 1/sqrt(d) folded in
    bq_ref,      # (1, H)   f32   query bias,   1/sqrt(d) folded in
    wkv_ref,     # (H, 2H)  bf16  fused [K | V] weight
    bkv_ref,     # (1, 2H)  f32   fused [K | V] bias
    wo_ref,      # (H, H)   bf16  output-dense weight
    bo_ref,      # (1, H)   f32   output-dense bias
    gamma_ref,   # (1, H)   f32   LayerNorm weight
    beta_ref,    # (1, H)   f32   LayerNorm bias
    o_ref,       # (1, TQ, H)
    k_s_ref,     # VMEM scratch (nh, S, d) bf16 -- K cache for current batch elem
    v_s_ref,     # VMEM scratch (nh, S, d) bf16 -- V cache for current batch elem
    *, num_heads, eps,
):
    f32, bf16 = jnp.float32, jnp.bfloat16
    nh = num_heads
    tq = xq_ref.shape[1]
    hidden = xq_ref.shape[2]
    d = hidden // nh

    # ---- K/V projection: once per batch element, one full-width (S,H)@(H,2H)
    #      MXU matmul; result split per head into the bf16 VMEM cache. ----
    @pl.when(pl.program_id(1) == 0)
    def _():
        kv = jnp.dot(xf_ref[0], wkv_ref[...],
                     preferred_element_type=f32) + bkv_ref[...]        # (S, 2H) f32
        for h in range(nh):
            k_s_ref[h] = kv[:, h * d:(h + 1) * d].astype(bf16)
            v_s_ref[h] = kv[:, hidden + h * d: hidden + (h + 1) * d].astype(bf16)

    x_tile = xq_ref[0]                                                 # (TQ, H) f32 residual
    xb = x_tile.astype(bf16)

    # ---- Q projection: one full-width (TQ,H)@(H,H) matmul (scale pre-folded) ----
    qf = jnp.dot(xb, wq_ref[...], preferred_element_type=f32) + bq_ref[...]   # (TQ, H)
    # Head-major relayout (cheap copy, TQ*H elements) for the batched attention core.
    q_all = jnp.stack([qf[:, h * d:(h + 1) * d] for h in range(nh)],
                      axis=0).astype(bf16)                             # (nh, TQ, d)

    k_all = k_s_ref[...]                                               # (nh, S, d) bf16
    v_all = v_s_ref[...]                                               # (nh, S, d) bf16

    # ---- batched-head scores; transposed contraction absorbed by the MXU ----
    scores = lax.dot_general(q_all, k_all,
                             dimension_numbers=(((2,), (2,)), ((0,), (0,))),
                             preferred_element_type=f32)               # (nh, TQ, S)
    scores = jnp.clip(scores, -10000.0, 10000.0)                       # parity with torch.clamp
    # Mask added with a (1,1,S) broadcast inside the add -- no (TQ,S) materialization.
    scores = scores + mask_ref[0, 0].astype(f32)[None, :, :]

    # ---- softmax with deferred normalization (f32 for v5e portability) ----
    m = jnp.max(scores, axis=-1, keepdims=True)
    e = jnp.exp(scores - m)
    l = jnp.sum(e, axis=-1, keepdims=True)
    ctx = lax.dot_general(e.astype(bf16), v_all,
                          dimension_numbers=(((2,), (1,)), ((0,), (0,))),
                          preferred_element_type=f32)                  # (nh, TQ, d)
    ctx = ctx * pl.reciprocal(l, approx=True)

    # ---- fold heads back to (TQ, H); ONE full-width output-dense matmul ----
    ctx_flat = jnp.concatenate([ctx[h] for h in range(nh)], axis=-1).astype(bf16)  # (TQ, H)
    proj = jnp.dot(ctx_flat, wo_ref[...], preferred_element_type=f32) + bo_ref[...]

    # ---- residual + LayerNorm (f32) ----
    y = proj + x_tile
    u = jnp.mean(y, axis=-1, keepdims=True)
    yc = y - u
    var = jnp.mean(yc * yc, axis=-1, keepdims=True)
    out = gamma_ref[...] * (yc * lax.rsqrt(var + eps)) + beta_ref[...]

    o_ref[0] = out.astype(o_ref.dtype)


def _choose_q_tile(seq_len):
    # Capped at 128: keeps the (nh,TQ,S) f32 score/exp intermediates inside the
    # v7x 64 MiB VMEM budget at long S.  On v6e/v5e (128 MiB) pass q_tile=256.
    for t in (128, 64, 32, 16, 8):
        if t <= seq_len and seq_len % t == 0:
            return t
    return seq_len


def _estimate_vmem_bytes(S, H, TQ, num_heads, d):
    """Rough padded VMEM footprint (weights single-buffered, activations x2)."""
    lane = 128
    pad = lambda c: -(-c // lane) * lane
    weights = H * pad(H) * 2 + H * pad(2 * H) * 2 + H * pad(H) * 2      # wq, wkv, wo (bf16)
    biases = 6 * pad(2 * H) * 4                                         # bq,bkv,bo,gamma,beta
    blocks = (2 * (TQ * pad(H) * 4)            # x query tile (f32), double-buffered
              + 2 * (TQ * pad(H) * 4)          # output tile
              + 2 * (S * pad(H) * 2)           # full-seq bf16
              + 2 * pad(S) * 4)                # mask
    scratch = 2 * num_heads * S * pad(d) * 2   # K/V head-major bf16 caches
    interm = (3 * num_heads * TQ * pad(S) * 4  # scores / exp / live copies
              + 6 * TQ * pad(H) * 4            # q / ctx / proj / LN temps
              + S * pad(2 * H) * 4)            # K/V projection intermediate
    return weights + biases + blocks + scratch + interm


def bert_attention(x, attention_mask, params, *, num_heads, eps=1e-12, q_tile=None):
    B, S, H = x.shape
    assert H % num_heads == 0
    d = H // num_heads
    TQ = q_tile if q_tile is not None else _choose_q_tile(S)
    assert S % TQ == 0, "sequence length must be divisible by the query tile"

    bf16, f32 = jnp.bfloat16, jnp.float32
    inv_sqrt_d = 1.0 / math.sqrt(d)

    # Host-side one-time weight prep: dense lane-wide matrices (no per-head
    # split), bf16 weights / f32 biases, 1/sqrt(d) folded into wq & bq, K and V
    # fused into one (H, 2H) matrix for the once-per-batch projection.
    wq = (params["wq"] * inv_sqrt_d).astype(bf16)                     # (H, H)
    bq = (params["bq"] * inv_sqrt_d).astype(f32)                      # (1, H)
    wkv = jnp.concatenate([params["wk"], params["wv"]], axis=1).astype(bf16)   # (H, 2H)
    bkv = jnp.concatenate([params["bk"], params["bv"]], axis=1).astype(f32)    # (1, 2H)
    wo = params["wo"].astype(bf16)                                    # (H, H)
    bo = params["bo"].astype(f32)                                     # (1, H)
    gamma = params["gamma"].astype(f32)
    beta = params["beta"].astype(f32)

    x_bf16 = x.astype(bf16)            # full-seq K/V-projection operand in bf16
    mask = attention_mask.astype(f32)

    kernel = functools.partial(_bert_attention_kernel, num_heads=num_heads, eps=eps)

    # vmem limit sized to need (with headroom), capped below physical VMEM.
    est = _estimate_vmem_bytes(S, H, TQ, num_heads, d)
    try:
        phys = pltpu.get_tpu_info().vmem_capacity_bytes
    except Exception:
        phys = 64 * 1024 * 1024        # conservative (v7x per-TC)
    vmem_limit = int(min(max(est * 3 // 2, 32 * 1024 * 1024), phys * 7 // 8))

    def run(single_buffer_weights):
        def const_spec(shape):
            n = len(shape)
            idx = lambda b, qi, _n=n: (0,) * _n
            if single_buffer_weights:
                # Weights/params never change across the grid: single-buffer
                # them (default is double-buffered) to save VMEM.
                return pl.BlockSpec(shape, idx, pipeline_mode=pl.Buffered(1))
            return pl.BlockSpec(shape, idx)

        return pl.pallas_call(
            kernel,
            out_shape=jax.ShapeDtypeStruct((B, S, H), x.dtype),
            grid_spec=pltpu.PrefetchScalarGridSpec(
                num_scalar_prefetch=0,
                grid=(B, S // TQ),
                in_specs=[
                    pl.BlockSpec((1, TQ, H), lambda b, qi: (b, qi, 0)),      # x query tile (f32)
                    pl.BlockSpec((1, S, H), lambda b, qi: (b, 0, 0)),        # x full seq (bf16)
                    pl.BlockSpec((1, 1, 1, S), lambda b, qi: (b, 0, 0, 0)),  # additive mask
                    const_spec((H, H)), const_spec((1, H)),                  # wq, bq (scaled)
                    const_spec((H, 2 * H)), const_spec((1, 2 * H)),          # wkv, bkv
                    const_spec((H, H)), const_spec((1, H)),                  # wo, bo
                    const_spec((1, H)), const_spec((1, H)),                  # gamma, beta
                ],
                out_specs=pl.BlockSpec((1, TQ, H), lambda b, qi: (b, qi, 0)),
                scratch_shapes=[
                    pltpu.VMEM((num_heads, S, d), jnp.bfloat16),   # K cache (heads, S, d)
                    pltpu.VMEM((num_heads, S, d), jnp.bfloat16),   # V cache (heads, S, d)
                ],
            ),
            compiler_params=pltpu.CompilerParams(
                # qi axis is 'arbitrary': the K/V scratch computed at qi == 0 is
                # carried across the query tiles of the same batch element.
                dimension_semantics=("parallel", "arbitrary"),
                vmem_limit_bytes=vmem_limit,
            ),
        )(x, x_bf16, mask, wq, bq, wkv, bkv, wo, bo, gamma, beta)

    try:
        return run(True)
    except Exception:
        # Fallback for jax versions without BlockSpec pipeline_mode / Buffered(1).
        return run(False)


def reference_bert_attention(x, attention_mask, params, *, num_heads, eps=1e-12):
    """Pure-JAX f32 reference mirroring the PyTorch forward (eval mode)."""
    B, S, H = x.shape
    d = H // num_heads
    xf = x.astype(jnp.float32)

    def proj(w, b):
        return jnp.einsum("bsh,hk->bsk", xf, w) + b[0]

    q = proj(params["wq"], params["bq"]).reshape(B, S, num_heads, d).transpose(0, 2, 1, 3)
    k = proj(params["wk"], params["bk"]).reshape(B, S, num_heads, d).transpose(0, 2, 1, 3)
    v = proj(params["wv"], params["bv"]).reshape(B, S, num_heads, d).transpose(0, 2, 1, 3)

    scores = jnp.einsum("bnqd,bnkd->bnqk", q, k) / math.sqrt(d)
    scores = jnp.clip(scores, -10000.0, 10000.0) + attention_mask
    probs = jax.nn.softmax(scores, axis=-1)
    ctx = jnp.einsum("bnqk,bnkd->bnqd", probs, v).transpose(0, 2, 1, 3).reshape(B, S, H)

    proj_out = jnp.einsum("bsh,hk->bsk", ctx, params["wo"]) + params["bo"][0]
    y = proj_out + xf
    u = jnp.mean(y, axis=-1, keepdims=True)
    s = jnp.mean((y - u) ** 2, axis=-1, keepdims=True)
    return params["gamma"][0] * ((y - u) / jnp.sqrt(s + eps)) + params["beta"][0]


if __name__ == "__main__":
    # Small BERT config: batch=2, seq=8, hidden=32, heads=4 (head_dim=8)
    B, S, H, NH = 2, 8, 32, 4

    key = jax.random.PRNGKey(0)
    keys = jax.random.split(key, 12)

    scale = 0.05
    params = {
        "wq": scale * jax.random.normal(keys[0], (H, H), jnp.float32),
        "bq": scale * jax.random.normal(keys[1], (1, H), jnp.float32),
        "wk": scale * jax.random.normal(keys[2], (H, H), jnp.float32),
        "bk": scale * jax.random.normal(keys[3], (1, H), jnp.float32),
        "wv": scale * jax.random.normal(keys[4], (H, H), jnp.float32),
        "bv": scale * jax.random.normal(keys[5], (1, H), jnp.float32),
        "wo": scale * jax.random.normal(keys[6], (H, H), jnp.float32),
        "bo": scale * jax.random.normal(keys[7], (1, H), jnp.float32),
        "gamma": jnp.ones((1, H), jnp.float32),
        "beta": jnp.zeros((1, H), jnp.float32),
    }

    x = jax.random.normal(keys[8], (B, S, H), jnp.float32)

    # Extended attention mask [B, 1, 1, S]: first batch attends to all tokens,
    # second masks the last 3 (additive 0 / -10000).
    valid = jnp.array([[1] * S, [1] * (S - 3) + [0] * 3], jnp.float32)
    attention_mask = (1.0 - valid)[:, None, None, :] * -10000.0

    out = bert_attention(x, attention_mask, params, num_heads=NH)
    out = jax.block_until_ready(out)

    ref = reference_bert_attention(x, attention_mask, params, num_heads=NH)
    assert out.shape == (B, S, H)
    max_err = float(jnp.max(jnp.abs(out - ref)))
    # bf16 matmul operands + approx reciprocal vs f32 reference -> loose tolerance.
    assert jnp.allclose(out, ref, rtol=3e-2, atol=3e-2), \
        f"mismatch vs reference (max abs err {max_err})"

    print("KERNEL_OK")
</pallas_src>

<mosaic_0001>
module attributes {stable_mosaic.version = 11 : i64} {
  func.func @_bert_attention_kernel(%arg0: i32, %arg1: i32, %arg2: memref<1x8x32xf32, #tpu.memory_space<vmem>>, %arg3: memref<1x8x32xbf16, #tpu.memory_space<vmem>>, %arg4: memref<1x1x1x8xf32, #tpu.memory_space<vmem>>, %arg5: memref<32x32xbf16, #tpu.memory_space<vmem>>, %arg6: memref<1x32xf32, #tpu.memory_space<vmem>>, %arg7: memref<32x64xbf16, #tpu.memory_space<vmem>>, %arg8: memref<1x64xf32, #tpu.memory_space<vmem>>, %arg9: memref<32x32xbf16, #tpu.memory_space<vmem>>, %arg10: memref<1x32xf32, #tpu.memory_space<vmem>>, %arg11: memref<1x32xf32, #tpu.memory_space<vmem>>, %arg12: memref<1x32xf32, #tpu.memory_space<vmem>>, %arg13: memref<1x8x32xf32, #tpu.memory_space<vmem>>, %arg14: memref<4x8x8xbf16, #tpu.memory_space<vmem>>, %arg15: memref<4x8x8xbf16, #tpu.memory_space<vmem>>) attributes {dimension_semantics = [#tpu.dimension_semantics<parallel>, #tpu.dimension_semantics<arbitrary>], iteration_bounds = array<i64: 2, 1>, scalar_prefetch = 0 : i64, scratch_operands = 2 : i64, tpu.core_type = #tpu.core_type<tc>, window_params = [{transform_indices = @transform_0, window_bounds = array<i64: 1, 8, 32>}, {transform_indices = @transform_1, window_bounds = array<i64: 1, 8, 32>}, {transform_indices = @transform_2, window_bounds = array<i64: 1, 1, 1, 8>}, {pipeline_mode = #tpu.pipeline_mode<synchronous>, transform_indices = @transform_3, window_bounds = array<i64: 32, 32>}, {pipeline_mode = #tpu.pipeline_mode<synchronous>, transform_indices = @transform_4, window_bounds = array<i64: 1, 32>}, {pipeline_mode = #tpu.pipeline_mode<synchronous>, transform_indices = @transform_5, window_bounds = array<i64: 32, 64>}, {pipeline_mode = #tpu.pipeline_mode<synchronous>, transform_indices = @transform_6, window_bounds = array<i64: 1, 64>}, {pipeline_mode = #tpu.pipeline_mode<synchronous>, transform_indices = @transform_7, window_bounds = array<i64: 32, 32>}, {pipeline_mode = #tpu.pipeline_mode<synchronous>, transform_indices = @transform_8, window_bounds = array<i64: 1, 32>}, {pipeline_mode = #tpu.pipeline_mode<synchronous>, transform_indices = @transform_9, window_bounds = array<i64: 1, 32>}, {pipeline_mode = #tpu.pipeline_mode<synchronous>, transform_indices = @transform_10, window_bounds = array<i64: 1, 32>}, {transform_indices = @transform_11, window_bounds = array<i64: 1, 8, 32>}]} {
    %c0_i32 = arith.constant 0 : i32
    %0 = arith.cmpi eq, %arg1, %c0_i32 : i32
    %1 = arith.extui %0 : i1 to i32
    %c0_i32_0 = arith.constant 0 : i32
    %2 = arith.cmpi ne, %1, %c0_i32_0 : i32
    scf.if %2 {
      %c0_40 = arith.constant 0 : index
      %c0_41 = arith.constant 0 : index
      %c0_42 = arith.constant 0 : index
      %86 = vector.load %arg3[%c0_40, %c0_41, %c0_42] : memref<1x8x32xbf16, #tpu.memory_space<vmem>>, vector<1x8x32xbf16>
      %87 = vector.shape_cast %86 : vector<1x8x32xbf16> to vector<8x32xbf16>
      %c0_43 = arith.constant 0 : index
      %c0_44 = arith.constant 0 : index
      %88 = vector.load %arg7[%c0_43, %c0_44] : memref<32x64xbf16, #tpu.memory_space<vmem>>, vector<32x64xbf16>
      %cst_45 = arith.constant dense<0.000000e+00> : vector<8x64xf32>
      %89 = tpu.matmul %87, %88, %cst_45 {dimension_numbers = #tpu.dot_dimension_numbers<[1], [0], [0], [1], [0, 0, 1, 1], [], []>} : vector<8x32xbf16>, vector<32x64xbf16>, vector<8x64xf32> -> vector<8x64xf32>
      %c0_46 = arith.constant 0 : index
      %c0_47 = arith.constant 0 : index
      %90 = vector.load %arg8[%c0_46, %c0_47] : memref<1x64xf32, #tpu.memory_space<vmem>>, vector<1x64xf32>
      %91 = vector.broadcast %90 : vector<1x64xf32> to vector<8x64xf32>
      %92 = arith.addf %89, %91 : vector<8x64xf32>
      %93 = vector.extract_strided_slice %92 {offsets = [0, 0], sizes = [8, 8], strides = [1, 1]} : vector<8x64xf32> to vector<8x8xf32>
      %94 = arith.truncf %93 : vector<8x8xf32> to vector<8x8xbf16>
      %c0_48 = arith.constant 0 : index
      %c0_49 = arith.constant 0 : index
      %c0_50 = arith.constant 0 : index
      %95 = vector.load %arg14[%c0_48, %c0_49, %c0_50] : memref<4x8x8xbf16, #tpu.memory_space<vmem>>, vector<1x8x8xbf16>
      %96 = vector.shape_cast %95 : vector<1x8x8xbf16> to vector<8x8xbf16>
      %97 = vector.shape_cast %94 : vector<8x8xbf16> to vector<1x8x8xbf16>
      tpu.vector_store %arg14[%c0_48, %c0_49, %c0_50], %97 {strides = array<i32>} : memref<4x8x8xbf16, #tpu.memory_space<vmem>>, vector<1x8x8xbf16>,
      %98 = vector.extract_strided_slice %92 {offsets = [0, 32], sizes = [8, 8], strides = [1, 1]} : vector<8x64xf32> to vector<8x8xf32>
      %99 = arith.truncf %98 : vector<8x8xf32> to vector<8x8xbf16>
      %c0_51 = arith.constant 0 : index
      %c0_52 = arith.constant 0 : index
      %c0_53 = arith.constant 0 : index
      %100 = vector.load %arg15[%c0_51, %c0_52, %c0_53] : memref<4x8x8xbf16, #tpu.memory_space<vmem>>, vector<1x8x8xbf16>
      %101 = vector.shape_cast %100 : vector<1x8x8xbf16> to vector<8x8xbf16>
      %102 = vector.shape_cast %99 : vector<8x8xbf16> to vector<1x8x8xbf16>
      tpu.vector_store %arg15[%c0_51, %c0_52, %c0_53], %102 {strides = array<i32>} : memref<4x8x8xbf16, #tpu.memory_space<vmem>>, vector<1x8x8xbf16>,
      %103 = vector.extract_strided_slice %92 {offsets = [0, 8], sizes = [8, 8], strides = [1, 1]} : vector<8x64xf32> to vector<8x8xf32>
      %104 = arith.truncf %103 : vector<8x8xf32> to vector<8x8xbf16>
      %c1 = arith.constant 1 : index
      %c0_54 = arith.constant 0 : index
      %c0_55 = arith.constant 0 : index
      %105 = vector.load %arg14[%c1, %c0_54, %c0_55] : memref<4x8x8xbf16, #tpu.memory_space<vmem>>, vector<1x8x8xbf16>
      %106 = vector.shape_cast %105 : vector<1x8x8xbf16> to vector<8x8xbf16>
      %107 = vector.shape_cast %104 : vector<8x8xbf16> to vector<1x8x8xbf16>
      tpu.vector_store %arg14[%c1, %c0_54, %c0_55], %107 {strides = array<i32>} : memref<4x8x8xbf16, #tpu.memory_space<vmem>>, vector<1x8x8xbf16>,
      %108 = vector.extract_strided_slice %92 {offsets = [0, 40], sizes = [8, 8], strides = [1, 1]} : vector<8x64xf32> to vector<8x8xf32>
      %109 = arith.truncf %108 : vector<8x8xf32> to vector<8x8xbf16>
      %c1_56 = arith.constant 1 : index
      %c0_57 = arith.constant 0 : index
      %c0_58 = arith.constant 0 : index
      %110 = vector.load %arg15[%c1_56, %c0_57, %c0_58] : memref<4x8x8xbf16, #tpu.memory_space<vmem>>, vector<1x8x8xbf16>
      %111 = vector.shape_cast %110 : vector<1x8x8xbf16> to vector<8x8xbf16>
      %112 = vector.shape_cast %109 : vector<8x8xbf16> to vector<1x8x8xbf16>
      tpu.vector_store %arg15[%c1_56, %c0_57, %c0_58], %112 {strides = array<i32>} : memref<4x8x8xbf16, #tpu.memory_space<vmem>>, vector<1x8x8xbf16>,
      %113 = vector.extract_strided_slice %92 {offsets = [0, 16], sizes = [8, 8], strides = [1, 1]} : vector<8x64xf32> to vector<8x8xf32>
      %114 = arith.truncf %113 : vector<8x8xf32> to vector<8x8xbf16>
      %c2 = arith.constant 2 : index
      %c0_59 = arith.constant 0 : index
      %c0_60 = arith.constant 0 : index
      %115 = vector.load %arg14[%c2, %c0_59, %c0_60] : memref<4x8x8xbf16, #tpu.memory_space<vmem>>, vector<1x8x8xbf16>
      %116 = vector.shape_cast %115 : vector<1x8x8xbf16> to vector<8x8xbf16>
      %117 = vector.shape_cast %114 : vector<8x8xbf16> to vector<1x8x8xbf16>
      tpu.vector_store %arg14[%c2, %c0_59, %c0_60], %117 {strides = array<i32>} : memref<4x8x8xbf16, #tpu.memory_space<vmem>>, vector<1x8x8xbf16>,
      %118 = vector.extract_strided_slice %92 {offsets = [0, 48], sizes = [8, 8], strides = [1, 1]} : vector<8x64xf32> to vector<8x8xf32>
      %119 = arith.truncf %118 : vector<8x8xf32> to vector<8x8xbf16>
      %c2_61 = arith.constant 2 : index
      %c0_62 = arith.constant 0 : index
      %c0_63 = arith.constant 0 : index
      %120 = vector.load %arg15[%c2_61, %c0_62, %c0_63] : memref<4x8x8xbf16, #tpu.memory_space<vmem>>, vector<1x8x8xbf16>
      %121 = vector.shape_cast %120 : vector<1x8x8xbf16> to vector<8x8xbf16>
      %122 = vector.shape_cast %119 : vector<8x8xbf16> to vector<1x8x8xbf16>
      tpu.vector_store %arg15[%c2_61, %c0_62, %c0_63], %122 {strides = array<i32>} : memref<4x8x8xbf16, #tpu.memory_space<vmem>>, vector<1x8x8xbf16>,
      %123 = vector.extract_strided_slice %92 {offsets = [0, 24], sizes = [8, 8], strides = [1, 1]} : vector<8x64xf32> to vector<8x8xf32>
      %124 = arith.truncf %123 : vector<8x8xf32> to vector<8x8xbf16>
      %c3 = arith.constant 3 : index
      %c0_64 = arith.constant 0 : index
      %c0_65 = arith.constant 0 : index
      %125 = vector.load %arg14[%c3, %c0_64, %c0_65] : memref<4x8x8xbf16, #tpu.memory_space<vmem>>, vector<1x8x8xbf16>
      %126 = vector.shape_cast %125 : vector<1x8x8xbf16> to vector<8x8xbf16>
      %127 = vector.shape_cast %124 : vector<8x8xbf16> to vector<1x8x8xbf16>
      tpu.vector_store %arg14[%c3, %c0_64, %c0_65], %127 {strides = array<i32>} : memref<4x8x8xbf16, #tpu.memory_space<vmem>>, vector<1x8x8xbf16>,
      %128 = vector.extract_strided_slice %92 {offsets = [0, 56], sizes = [8, 8], strides = [1, 1]} : vector<8x64xf32> to vector<8x8xf32>
      %129 = arith.truncf %128 : vector<8x8xf32> to vector<8x8xbf16>
      %c3_66 = arith.constant 3 : index
      %c0_67 = arith.constant 0 : index
      %c0_68 = arith.constant 0 : index
      %130 = vector.load %arg15[%c3_66, %c0_67, %c0_68] : memref<4x8x8xbf16, #tpu.memory_space<vmem>>, vector<1x8x8xbf16>
      %131 = vector.shape_cast %130 : vector<1x8x8xbf16> to vector<8x8xbf16>
      %132 = vector.shape_cast %129 : vector<8x8xbf16> to vector<1x8x8xbf16>
      tpu.vector_store %arg15[%c3_66, %c0_67, %c0_68], %132 {strides = array<i32>} : memref<4x8x8xbf16, #tpu.memory_space<vmem>>, vector<1x8x8xbf16>,
    } else {
    }
    %c0 = arith.constant 0 : index
    %c0_1 = arith.constant 0 : index
    %c0_2 = arith.constant 0 : index
    %3 = vector.load %arg2[%c0, %c0_1, %c0_2] : memref<1x8x32xf32, #tpu.memory_space<vmem>>, vector<1x8x32xf32>
    %4 = vector.shape_cast %3 : vector<1x8x32xf32> to vector<8x32xf32>
    %5 = arith.truncf %4 : vector<8x32xf32> to vector<8x32xbf16>
    %c0_3 = arith.constant 0 : index
    %c0_4 = arith.constant 0 : index
    %6 = vector.load %arg5[%c0_3, %c0_4] : memref<32x32xbf16, #tpu.memory_space<vmem>>, vector<32x32xbf16>
    %cst = arith.constant dense<0.000000e+00> : vector<8x32xf32>
    %7 = tpu.matmul %5, %6, %cst {dimension_numbers = #tpu.dot_dimension_numbers<[1], [0], [0], [1], [0, 0, 1, 1], [], []>} : vector<8x32xbf16>, vector<32x32xbf16>, vector<8x32xf32> -> vector<8x32xf32>
    %c0_5 = arith.constant 0 : index
    %c0_6 = arith.constant 0 : index
    %8 = vector.load %arg6[%c0_5, %c0_6] : memref<1x32xf32, #tpu.memory_space<vmem>>, vector<1x32xf32>
    %9 = vector.broadcast %8 : vector<1x32xf32> to vector<8x32xf32>
    %10 = arith.addf %7, %9 : vector<8x32xf32>
    %11 = vector.extract_strided_slice %10 {offsets = [0, 0], sizes = [8, 8], strides = [1, 1]} : vector<8x32xf32> to vector<8x8xf32>
    %12 = vector.extract_strided_slice %10 {offsets = [0, 8], sizes = [8, 8], strides = [1, 1]} : vector<8x32xf32> to vector<8x8xf32>
    %13 = vector.extract_strided_slice %10 {offsets = [0, 16], sizes = [8, 8], strides = [1, 1]} : vector<8x32xf32> to vector<8x8xf32>
    %14 = vector.extract_strided_slice %10 {offsets = [0, 24], sizes = [8, 8], strides = [1, 1]} : vector<8x32xf32> to vector<8x8xf32>
    %15 = vector.shape_cast %11 : vector<8x8xf32> to vector<1x8x8xf32>
    %16 = vector.shape_cast %12 : vector<8x8xf32> to vector<1x8x8xf32>
    %17 = vector.shape_cast %13 : vector<8x8xf32> to vector<1x8x8xf32>
    %18 = vector.shape_cast %14 : vector<8x8xf32> to vector<1x8x8xf32>
    %19 = tpu.concatenate %15, %16, %17, %18 in 0 : vector<1x8x8xf32>, vector<1x8x8xf32>, vector<1x8x8xf32>, vector<1x8x8xf32> -> vector<4x8x8xf32>
    %20 = arith.truncf %19 : vector<4x8x8xf32> to vector<4x8x8xbf16>
    %c0_7 = arith.constant 0 : index
    %c0_8 = arith.constant 0 : index
    %c0_9 = arith.constant 0 : index
    %21 = vector.load %arg14[%c0_7, %c0_8, %c0_9] : memref<4x8x8xbf16, #tpu.memory_space<vmem>>, vector<4x8x8xbf16>
    %c0_10 = arith.constant 0 : index
    %c0_11 = arith.constant 0 : index
    %c0_12 = arith.constant 0 : index
    %22 = vector.load %arg15[%c0_10, %c0_11, %c0_12] : memref<4x8x8xbf16, #tpu.memory_space<vmem>>, vector<4x8x8xbf16>
    %cst_13 = arith.constant dense<0.000000e+00> : vector<4x8x8xf32>
    %23 = tpu.matmul %20, %21, %cst_13 {dimension_numbers = #tpu.dot_dimension_numbers<[2], [2], [1], [1], [0, 0, 0, 1, 1, 1], [0], [0]>} : vector<4x8x8xbf16>, vector<4x8x8xbf16>, vector<4x8x8xf32> -> vector<4x8x8xf32>
    %cst_14 = arith.constant -1.000000e+04 : f32
    %cst_15 = arith.constant 1.000000e+04 : f32
    %24 = vector.broadcast %cst_14 : f32 to vector<4x8x8xf32>
    %25 = arith.maximumf %24, %23 : vector<4x8x8xf32>
    %26 = vector.broadcast %cst_15 : f32 to vector<4x8x8xf32>
    %27 = arith.minimumf %26, %25 : vector<4x8x8xf32>
    %c0_16 = arith.constant 0 : index
    %c0_17 = arith.constant 0 : index
    %c0_18 = arith.constant 0 : index
    %c0_19 = arith.constant 0 : index
    %28 = vector.load %arg4[%c0_16, %c0_17, %c0_18, %c0_19] : memref<1x1x1x8xf32, #tpu.memory_space<vmem>>, vector<1x1x1x8xf32>
    %29 = vector.shape_cast %28 : vector<1x1x1x8xf32> to vector<1x8xf32>
    %30 = vector.shape_cast %29 : vector<1x8xf32> to vector<1x1x8xf32>
    %31 = vector.broadcast %30 : vector<1x1x8xf32> to vector<4x8x8xf32>
    %32 = arith.addf %27, %31 : vector<4x8x8xf32>
    %cst_20 = arith.constant dense<0xFF800000> : vector<4x8xf32>
    %33 = vector.multi_reduction <maximumf>, %32, %cst_20 [2] : vector<4x8x8xf32> to vector<4x8xf32>
    %34 = vector.shape_cast %33 : vector<4x8xf32> to vector<4x8x1xf32>
    %35 = vector.broadcast %34 : vector<4x8x1xf32> to vector<4x8x8xf32>
    %36 = arith.subf %32, %35 : vector<4x8x8xf32>
    %37 = math.exp %36 : vector<4x8x8xf32>
    %cst_21 = arith.constant dense<0.000000e+00> : vector<4x8xf32>
    %38 = vector.multi_reduction <add>, %37, %cst_21 [2] : vector<4x8x8xf32> to vector<4x8xf32>
    %39 = vector.shape_cast %38 : vector<4x8xf32> to vector<4x8x1xf32>
    %40 = arith.truncf %37 : vector<4x8x8xf32> to vector<4x8x8xbf16>
    %cst_22 = arith.constant dense<0.000000e+00> : vector<4x8x8xf32>
    %41 = tpu.matmul %40, %22, %cst_22 {dimension_numbers = #tpu.dot_dimension_numbers<[2], [1], [1], [2], [0, 0, 0, 1, 1, 2], [0], [0]>} : vector<4x8x8xbf16>, vector<4x8x8xbf16>, vector<4x8x8xf32> -> vector<4x8x8xf32>
    %42 = tpu.reciprocal %39 {approx = true} : vector<4x8x1xf32> -> vector<4x8x1xf32>
    %43 = vector.broadcast %42 : vector<4x8x1xf32> to vector<4x8x8xf32>
    %44 = arith.mulf %41, %43 : vector<4x8x8xf32>
    %45 = vector.extract_strided_slice %44 {offsets = [0, 0, 0], sizes = [1, 8, 8], strides = [1, 1, 1]} : vector<4x8x8xf32> to vector<1x8x8xf32>
    %46 = vector.shape_cast %45 : vector<1x8x8xf32> to vector<8x8xf32>
    %47 = vector.extract_strided_slice %44 {offsets = [1, 0, 0], sizes = [1, 8, 8], strides = [1, 1, 1]} : vector<4x8x8xf32> to vector<1x8x8xf32>
    %48 = vector.shape_cast %47 : vector<1x8x8xf32> to vector<8x8xf32>
    %49 = vector.extract_strided_slice %44 {offsets = [2, 0, 0], sizes = [1, 8, 8], strides = [1, 1, 1]} : vector<4x8x8xf32> to vector<1x8x8xf32>
    %50 = vector.shape_cast %49 : vector<1x8x8xf32> to vector<8x8xf32>
    %51 = vector.extract_strided_slice %44 {offsets = [3, 0, 0], sizes = [1, 8, 8], strides = [1, 1, 1]} : vector<4x8x8xf32> to vector<1x8x8xf32>
    %52 = vector.shape_cast %51 : vector<1x8x8xf32> to vector<8x8xf32>
    %53 = tpu.concatenate %46, %48, %50, %52 in 1 : vector<8x8xf32>, vector<8x8xf32>, vector<8x8xf32>, vector<8x8xf32> -> vector<8x32xf32>
    %54 = arith.truncf %53 : vector<8x32xf32> to vector<8x32xbf16>
    %c0_23 = arith.constant 0 : index
    %c0_24 = arith.constant 0 : index
    %55 = vector.load %arg9[%c0_23, %c0_24] : memref<32x32xbf16, #tpu.memory_space<vmem>>, vector<32x32xbf16>
    %cst_25 = arith.constant dense<0.000000e+00> : vector<8x32xf32>
    %56 = tpu.matmul %54, %55, %cst_25 {dimension_numbers = #tpu.dot_dimension_numbers<[1], [0], [0], [1], [0, 0, 1, 1], [], []>} : vector<8x32xbf16>, vector<32x32xbf16>, vector<8x32xf32> -> vector<8x32xf32>
    %c0_26 = arith.constant 0 : index
    %c0_27 = arith.constant 0 : index
    %57 = vector.load %arg10[%c0_26, %c0_27] : memref<1x32xf32, #tpu.memory_space<vmem>>, vector<1x32xf32>
    %58 = vector.broadcast %57 : vector<1x32xf32> to vector<8x32xf32>
    %59 = arith.addf %56, %58 : vector<8x32xf32>
    %60 = arith.addf %59, %4 : vector<8x32xf32>
    %cst_28 = arith.constant dense<0.000000e+00> : vector<8xf32>
    %61 = vector.multi_reduction <add>, %60, %cst_28 [1] : vector<8x32xf32> to vector<8xf32>
    %62 = vector.shape_cast %61 : vector<8xf32> to vector<8x1xf32>
    %cst_29 = arith.constant 3.200000e+01 : f32
    %63 = vector.broadcast %cst_29 : f32 to vector<8x1xf32>
    %64 = arith.divf %62, %63 : vector<8x1xf32>
    %65 = vector.broadcast %64 : vector<8x1xf32> to vector<8x32xf32>
    %66 = arith.subf %60, %65 : vector<8x32xf32>
    %67 = arith.mulf %66, %66 : vector<8x32xf32>
    %cst_30 = arith.constant dense<0.000000e+00> : vector<8xf32>
    %68 = vector.multi_reduction <add>, %67, %cst_30 [1] : vector<8x32xf32> to vector<8xf32>
    %69 = vector.shape_cast %68 : vector<8xf32> to vector<8x1xf32>
    %cst_31 = arith.constant 3.200000e+01 : f32
    %70 = vector.broadcast %cst_31 : f32 to vector<8x1xf32>
    %71 = arith.divf %69, %70 : vector<8x1xf32>
    %c0_32 = arith.constant 0 : index
    %c0_33 = arith.constant 0 : index
    %72 = vector.load %arg11[%c0_32, %c0_33] : memref<1x32xf32, #tpu.memory_space<vmem>>, vector<1x32xf32>
    %cst_34 = arith.constant 9.99999996E-13 : f32
    %73 = vector.broadcast %cst_34 : f32 to vector<8x1xf32>
    %74 = arith.addf %71, %73 : vector<8x1xf32>
    %75 = math.rsqrt %74 : vector<8x1xf32>
    %76 = vector.broadcast %75 : vector<8x1xf32> to vector<8x32xf32>
    %77 = arith.mulf %66, %76 : vector<8x32xf32>
    %78 = vector.broadcast %72 : vector<1x32xf32> to vector<8x32xf32>
    %79 = arith.mulf %78, %77 : vector<8x32xf32>
    %c0_35 = arith.constant 0 : index
    %c0_36 = arith.constant 0 : index
    %80 = vector.load %arg12[%c0_35, %c0_36] : memref<1x32xf32, #tpu.memory_space<vmem>>, vector<1x32xf32>
    %81 = vector.broadcast %80 : vector<1x32xf32> to vector<8x32xf32>
    %82 = arith.addf %79, %81 : vector<8x32xf32>
    %c0_37 = arith.constant 0 : index
    %c0_38 = arith.constant 0 : index
    %c0_39 = arith.constant 0 : index
    %83 = vector.load %arg13[%c0_37, %c0_38, %c0_39] : memref<1x8x32xf32, #tpu.memory_space<vmem>>, vector<1x8x32xf32>
    %84 = vector.shape_cast %83 : vector<1x8x32xf32> to vector<8x32xf32>
    %85 = vector.shape_cast %82 : vector<8x32xf32> to vector<1x8x32xf32>
    tpu.vector_store %arg13[%c0_37, %c0_38, %c0_39], %85 {strides = array<i32>} : memref<1x8x32xf32, #tpu.memory_space<vmem>>, vector<1x8x32xf32>,
    return
  }
  func.func @transform_0(%arg0: i32, %arg1: i32) -> (i32, i32, i32) {
    %c0_i32 = arith.constant 0 : i32
    %c0_i32_0 = arith.constant 0 : i32
    return %arg0, %arg1, %c0_i32 : i32, i32, i32
  }
  func.func @transform_1(%arg0: i32, %arg1: i32) -> (i32, i32, i32) {
    %c0_i32 = arith.constant 0 : i32
    %c0_i32_0 = arith.constant 0 : i32
    %c0_i32_1 = arith.constant 0 : i32
    return %arg0, %c0_i32, %c0_i32_0 : i32, i32, i32
  }
  func.func @transform_2(%arg0: i32, %arg1: i32) -> (i32, i32, i32, i32) {
    %c0_i32 = arith.constant 0 : i32
    %c0_i32_0 = arith.constant 0 : i32
    %c0_i32_1 = arith.constant 0 : i32
    %c0_i32_2 = arith.constant 0 : i32
    return %arg0, %c0_i32, %c0_i32_0, %c0_i32_1 : i32, i32, i32, i32
  }
  func.func @transform_3(%arg0: i32, %arg1: i32) -> (i32, i32) {
    %c0_i32 = arith.constant 0 : i32
    %c0_i32_0 = arith.constant 0 : i32
    %c0_i32_1 = arith.constant 0 : i32
    return %c0_i32, %c0_i32_0 : i32, i32
  }
  func.func @transform_4(%arg0: i32, %arg1: i32) -> (i32, i32) {
    %c0_i32 = arith.constant 0 : i32
    %c0_i32_0 = arith.constant 0 : i32
    %c0_i32_1 = arith.constant 0 : i32
    return %c0_i32, %c0_i32_0 : i32, i32
  }
  func.func @transform_5(%arg0: i32, %arg1: i32) -> (i32, i32) {
    %c0_i32 = arith.constant 0 : i32
    %c0_i32_0 = arith.constant 0 : i32
    %c0_i32_1 = arith.constant 0 : i32
    return %c0_i32, %c0_i32_0 : i32, i32
  }
  func.func @transform_6(%arg0: i32, %arg1: i32) -> (i32, i32) {
    %c0_i32 = arith.constant 0 : i32
    %c0_i32_0 = arith.constant 0 : i32
    %c0_i32_1 = arith.constant 0 : i32
    return %c0_i32, %c0_i32_0 : i32, i32
  }
  func.func @transform_7(%arg0: i32, %arg1: i32) -> (i32, i32) {
    %c0_i32 = arith.constant 0 : i32
    %c0_i32_0 = arith.constant 0 : i32
    %c0_i32_1 = arith.constant 0 : i32
    return %c0_i32, %c0_i32_0 : i32, i32
  }
  func.func @transform_8(%arg0: i32, %arg1: i32) -> (i32, i32) {
    %c0_i32 = arith.constant 0 : i32
    %c0_i32_0 = arith.constant 0 : i32
    %c0_i32_1 = arith.constant 0 : i32
    return %c0_i32, %c0_i32_0 : i32, i32
  }
  func.func @transform_9(%arg0: i32, %arg1: i32) -> (i32, i32) {
    %c0_i32 = arith.constant 0 : i32
    %c0_i32_0 = arith.constant 0 : i32
    %c0_i32_1 = arith.constant 0 : i32
    return %c0_i32, %c0_i32_0 : i32, i32
  }
  func.func @transform_10(%arg0: i32, %arg1: i32) -> (i32, i32) {
    %c0_i32 = arith.constant 0 : i32
    %c0_i32_0 = arith.constant 0 : i32
    %c0_i32_1 = arith.constant 0 : i32
    return %c0_i32, %c0_i32_0 : i32, i32
  }
  func.func @transform_11(%arg0: i32, %arg1: i32) -> (i32, i32, i32) {
    %c0_i32 = arith.constant 0 : i32
    %c0_i32_0 = arith.constant 0 : i32
    return %arg0, %arg1, %c0_i32 : i32, i32, i32
  }
}

module attributes {stable_mosaic.version = 11 : i64} {
  func.func @_bert_attention_kernel(%arg0: i32, %arg1: i32, %arg2: memref<1x8x32xf32, #tpu.memory_space<vmem>>, %arg3: memref<1x8x32xbf16, #tpu.memory_space<vmem>>, %arg4: memref<1x1x1x8xf32, #tpu.memory_space<vmem>>, %arg5: memref<32x32xbf16, #tpu.memory_space<vmem>>, %arg6: memref<1x32xf32, #tpu.memory_space<vmem>>, %arg7: memref<32x64xbf16, #tpu.memory_space<vmem>>, %arg8: memref<1x64xf32, #tpu.memory_space<vmem>>, %arg9: memref<32x32xbf16, #tpu.memory_space<vmem>>, %arg10: memref<1x32xf32, #tpu.memory_space<vmem>>, %arg11: memref<1x32xf32, #tpu.memory_space<vmem>>, %arg12: memref<1x32xf32, #tpu.memory_space<vmem>>, %arg13: memref<1x8x32xf32, #tpu.memory_space<vmem>>, %arg14: memref<4x8x8xbf16, #tpu.memory_space<vmem>>, %arg15: memref<4x8x8xbf16, #tpu.memory_space<vmem>>) attributes {dimension_semantics = [#tpu.dimension_semantics<parallel>, #tpu.dimension_semantics<arbitrary>], iteration_bounds = array<i64: 2, 1>, scalar_prefetch = 0 : i64, scratch_operands = 2 : i64, tpu.core_type = #tpu.core_type<tc>, window_params = [{transform_indices = @transform_0, window_bounds = array<i64: 1, 8, 32>}, {transform_indices = @transform_1, window_bounds = array<i64: 1, 8, 32>}, {transform_indices = @transform_2, window_bounds = array<i64: 1, 1, 1, 8>}, {pipeline_mode = #tpu.pipeline_mode<synchronous>, transform_indices = @transform_3, window_bounds = array<i64: 32, 32>}, {pipeline_mode = #tpu.pipeline_mode<synchronous>, transform_indices = @transform_4, window_bounds = array<i64: 1, 32>}, {pipeline_mode = #tpu.pipeline_mode<synchronous>, transform_indices = @transform_5, window_bounds = array<i64: 32, 64>}, {pipeline_mode = #tpu.pipeline_mode<synchronous>, transform_indices = @transform_6, window_bounds = array<i64: 1, 64>}, {pipeline_mode = #tpu.pipeline_mode<synchronous>, transform_indices = @transform_7, window_bounds = array<i64: 32, 32>}, {pipeline_mode = #tpu.pipeline_mode<synchronous>, transform_indices = @transform_8, window_bounds = array<i64: 1, 32>}, {pipeline_mode = #tpu.pipeline_mode<synchronous>, transform_indices = @transform_9, window_bounds = array<i64: 1, 32>}, {pipeline_mode = #tpu.pipeline_mode<synchronous>, transform_indices = @transform_10, window_bounds = array<i64: 1, 32>}, {transform_indices = @transform_11, window_bounds = array<i64: 1, 8, 32>}]} {
    %c0_i32 = arith.constant 0 : i32
    %0 = arith.cmpi eq, %arg1, %c0_i32 : i32
    %1 = arith.extui %0 : i1 to i32
    %c0_i32_0 = arith.constant 0 : i32
    %2 = arith.cmpi ne, %1, %c0_i32_0 : i32
    scf.if %2 {
      %c0_40 = arith.constant 0 : index
      %c0_41 = arith.constant 0 : index
      %c0_42 = arith.constant 0 : index
      %86 = vector.load %arg3[%c0_40, %c0_41, %c0_42] : memref<1x8x32xbf16, #tpu.memory_space<vmem>>, vector<1x8x32xbf16>
      %87 = vector.shape_cast %86 : vector<1x8x32xbf16> to vector<8x32xbf16>
      %c0_43 = arith.constant 0 : index
      %c0_44 = arith.constant 0 : index
      %88 = vector.load %arg7[%c0_43, %c0_44] : memref<32x64xbf16, #tpu.memory_space<vmem>>, vector<32x64xbf16>
      %cst_45 = arith.constant dense<0.000000e+00> : vector<8x64xf32>
      %89 = tpu.matmul %87, %88, %cst_45 {dimension_numbers = #tpu.dot_dimension_numbers<[1], [0], [0], [1], [0, 0, 1, 1], [], []>} : vector<8x32xbf16>, vector<32x64xbf16>, vector<8x64xf32> -> vector<8x64xf32>
      %c0_46 = arith.constant 0 : index
      %c0_47 = arith.constant 0 : index
      %90 = vector.load %arg8[%c0_46, %c0_47] : memref<1x64xf32, #tpu.memory_space<vmem>>, vector<1x64xf32>
      %91 = vector.broadcast %90 : vector<1x64xf32> to vector<8x64xf32>
      %92 = arith.addf %89, %91 : vector<8x64xf32>
      %93 = vector.extract_strided_slice %92 {offsets = [0, 0], sizes = [8, 8], strides = [1, 1]} : vector<8x64xf32> to vector<8x8xf32>
      %94 = arith.truncf %93 : vector<8x8xf32> to vector<8x8xbf16>
      %c0_48 = arith.constant 0 : index
      %c0_49 = arith.constant 0 : index
      %c0_50 = arith.constant 0 : index
      %95 = vector.load %arg14[%c0_48, %c0_49, %c0_50] : memref<4x8x8xbf16, #tpu.memory_space<vmem>>, vector<1x8x8xbf16>
      %96 = vector.shape_cast %95 : vector<1x8x8xbf16> to vector<8x8xbf16>
      %97 = vector.shape_cast %94 : vector<8x8xbf16> to vector<1x8x8xbf16>
      tpu.vector_store %arg14[%c0_48, %c0_49, %c0_50], %97 {strides = array<i32>} : memref<4x8x8xbf16, #tpu.memory_space<vmem>>, vector<1x8x8xbf16>,
      %98 = vector.extract_strided_slice %92 {offsets = [0, 32], sizes = [8, 8], strides = [1, 1]} : vector<8x64xf32> to vector<8x8xf32>
      %99 = arith.truncf %98 : vector<8x8xf32> to vector<8x8xbf16>
      %c0_51 = arith.constant 0 : index
      %c0_52 = arith.constant 0 : index
      %c0_53 = arith.constant 0 : index
      %100 = vector.load %arg15[%c0_51, %c0_52, %c0_53] : memref<4x8x8xbf16, #tpu.memory_space<vmem>>, vector<1x8x8xbf16>
      %101 = vector.shape_cast %100 : vector<1x8x8xbf16> to vector<8x8xbf16>
      %102 = vector.shape_cast %99 : vector<8x8xbf16> to vector<1x8x8xbf16>
      tpu.vector_store %arg15[%c0_51, %c0_52, %c0_53], %102 {strides = array<i32>} : memref<4x8x8xbf16, #tpu.memory_space<vmem>>, vector<1x8x8xbf16>,
      %103 = vector.extract_strided_slice %92 {offsets = [0, 8], sizes = [8, 8], strides = [1, 1]} : vector<8x64xf32> to vector<8x8xf32>
      %104 = arith.truncf %103 : vector<8x8xf32> to vector<8x8xbf16>
      %c1 = arith.constant 1 : index
      %c0_54 = arith.constant 0 : index
      %c0_55 = arith.constant 0 : index
      %105 = vector.load %arg14[%c1, %c0_54, %c0_55] : memref<4x8x8xbf16, #tpu.memory_space<vmem>>, vector<1x8x8xbf16>
      %106 = vector.shape_cast %105 : vector<1x8x8xbf16> to vector<8x8xbf16>
      %107 = vector.shape_cast %104 : vector<8x8xbf16> to vector<1x8x8xbf16>
      tpu.vector_store %arg14[%c1, %c0_54, %c0_55], %107 {strides = array<i32>} : memref<4x8x8xbf16, #tpu.memory_space<vmem>>, vector<1x8x8xbf16>,
      %108 = vector.extract_strided_slice %92 {offsets = [0, 40], sizes = [8, 8], strides = [1, 1]} : vector<8x64xf32> to vector<8x8xf32>
      %109 = arith.truncf %108 : vector<8x8xf32> to vector<8x8xbf16>
      %c1_56 = arith.constant 1 : index
      %c0_57 = arith.constant 0 : index
      %c0_58 = arith.constant 0 : index
      %110 = vector.load %arg15[%c1_56, %c0_57, %c0_58] : memref<4x8x8xbf16, #tpu.memory_space<vmem>>, vector<1x8x8xbf16>
      %111 = vector.shape_cast %110 : vector<1x8x8xbf16> to vector<8x8xbf16>
      %112 = vector.shape_cast %109 : vector<8x8xbf16> to vector<1x8x8xbf16>
      tpu.vector_store %arg15[%c1_56, %c0_57, %c0_58], %112 {strides = array<i32>} : memref<4x8x8xbf16, #tpu.memory_space<vmem>>, vector<1x8x8xbf16>,
      %113 = vector.extract_strided_slice %92 {offsets = [0, 16], sizes = [8, 8], strides = [1, 1]} : vector<8x64xf32> to vector<8x8xf32>
      %114 = arith.truncf %113 : vector<8x8xf32> to vector<8x8xbf16>
      %c2 = arith.constant 2 : index
      %c0_59 = arith.constant 0 : index
      %c0_60 = arith.constant 0 : index
      %115 = vector.load %arg14[%c2, %c0_59, %c0_60] : memref<4x8x8xbf16, #tpu.memory_space<vmem>>, vector<1x8x8xbf16>
      %116 = vector.shape_cast %115 : vector<1x8x8xbf16> to vector<8x8xbf16>
      %117 = vector.shape_cast %114 : vector<8x8xbf16> to vector<1x8x8xbf16>
      tpu.vector_store %arg14[%c2, %c0_59, %c0_60], %117 {strides = array<i32>} : memref<4x8x8xbf16, #tpu.memory_space<vmem>>, vector<1x8x8xbf16>,
      %118 = vector.extract_strided_slice %92 {offsets = [0, 48], sizes = [8, 8], strides = [1, 1]} : vector<8x64xf32> to vector<8x8xf32>
      %119 = arith.truncf %118 : vector<8x8xf32> to vector<8x8xbf16>
      %c2_61 = arith.constant 2 : index
      %c0_62 = arith.constant 0 : index
      %c0_63 = arith.constant 0 : index
      %120 = vector.load %arg15[%c2_61, %c0_62, %c0_63] : memref<4x8x8xbf16, #tpu.memory_space<vmem>>, vector<1x8x8xbf16>
      %121 = vector.shape_cast %120 : vector<1x8x8xbf16> to vector<8x8xbf16>
      %122 = vector.shape_cast %119 : vector<8x8xbf16> to vector<1x8x8xbf16>
      tpu.vector_store %arg15[%c2_61, %c0_62, %c0_63], %122 {strides = array<i32>} : memref<4x8x8xbf16, #tpu.memory_space<vmem>>, vector<1x8x8xbf16>,
      %123 = vector.extract_strided_slice %92 {offsets = [0, 24], sizes = [8, 8], strides = [1, 1]} : vector<8x64xf32> to vector<8x8xf32>
      %124 = arith.truncf %123 : vector<8x8xf32> to vector<8x8xbf16>
      %c3 = arith.constant 3 : index
      %c0_64 = arith.constant 0 : index
      %c0_65 = arith.constant 0 : index
      %125 = vector.load %arg14[%c3, %c0_64, %c0_65] : memref<4x8x8xbf16, #tpu.memory_space<vmem>>, vector<1x8x8xbf16>
      %126 = vector.shape_cast %125 : vector<1x8x8xbf16> to vector<8x8xbf16>
      %127 = vector.shape_cast %124 : vector<8x8xbf16> to vector<1x8x8xbf16>
      tpu.vector_store %arg14[%c3, %c0_64, %c0_65], %127 {strides = array<i32>} : memref<4x8x8xbf16, #tpu.memory_space<vmem>>, vector<1x8x8xbf16>,
      %128 = vector.extract_strided_slice %92 {offsets = [0, 56], sizes = [8, 8], strides = [1, 1]} : vector<8x64xf32> to vector<8x8xf32>
      %129 = arith.truncf %128 : vector<8x8xf32> to vector<8x8xbf16>
      %c3_66 = arith.constant 3 : index
      %c0_67 = arith.constant 0 : index
      %c0_68 = arith.constant 0 : index
      %130 = vector.load %arg15[%c3_66, %c0_67, %c0_68] : memref<4x8x8xbf16, #tpu.memory_space<vmem>>, vector<1x8x8xbf16>
      %131 = vector.shape_cast %130 : vector<1x8x8xbf16> to vector<8x8xbf16>
      %132 = vector.shape_cast %129 : vector<8x8xbf16> to vector<1x8x8xbf16>
      tpu.vector_store %arg15[%c3_66, %c0_67, %c0_68], %132 {strides = array<i32>} : memref<4x8x8xbf16, #tpu.memory_space<vmem>>, vector<1x8x8xbf16>,
    } else {
    }
    %c0 = arith.constant 0 : index
    %c0_1 = arith.constant 0 : index
    %c0_2 = arith.constant 0 : index
    %3 = vector.load %arg2[%c0, %c0_1, %c0_2] : memref<1x8x32xf32, #tpu.memory_space<vmem>>, vector<1x8x32xf32>
    %4 = vector.shape_cast %3 : vector<1x8x32xf32> to vector<8x32xf32>
    %5 = arith.truncf %4 : vector<8x32xf32> to vector<8x32xbf16>
    %c0_3 = arith.constant 0 : index
    %c0_4 = arith.constant 0 : index
    %6 = vector.load %arg5[%c0_3, %c0_4] : memref<32x32xbf16, #tpu.memory_space<vmem>>, vector<32x32xbf16>
    %cst = arith.constant dense<0.000000e+00> : vector<8x32xf32>
    %7 = tpu.matmul %5, %6, %cst {dimension_numbers = #tpu.dot_dimension_numbers<[1], [0], [0], [1], [0, 0, 1, 1], [], []>} : vector<8x32xbf16>, vector<32x32xbf16>, vector<8x32xf32> -> vector<8x32xf32>
    %c0_5 = arith.constant 0 : index
    %c0_6 = arith.constant 0 : index
    %8 = vector.load %arg6[%c0_5, %c0_6] : memref<1x32xf32, #tpu.memory_space<vmem>>, vector<1x32xf32>
    %9 = vector.broadcast %8 : vector<1x32xf32> to vector<8x32xf32>
    %10 = arith.addf %7, %9 : vector<8x32xf32>
    %11 = vector.extract_strided_slice %10 {offsets = [0, 0], sizes = [8, 8], strides = [1, 1]} : vector<8x32xf32> to vector<8x8xf32>
    %12 = vector.extract_strided_slice %10 {offsets = [0, 8], sizes = [8, 8], strides = [1, 1]} : vector<8x32xf32> to vector<8x8xf32>
    %13 = vector.extract_strided_slice %10 {offsets = [0, 16], sizes = [8, 8], strides = [1, 1]} : vector<8x32xf32> to vector<8x8xf32>
    %14 = vector.extract_strided_slice %10 {offsets = [0, 24], sizes = [8, 8], strides = [1, 1]} : vector<8x32xf32> to vector<8x8xf32>
    %15 = vector.shape_cast %11 : vector<8x8xf32> to vector<1x8x8xf32>
    %16 = vector.shape_cast %12 : vector<8x8xf32> to vector<1x8x8xf32>
    %17 = vector.shape_cast %13 : vector<8x8xf32> to vector<1x8x8xf32>
    %18 = vector.shape_cast %14 : vector<8x8xf32> to vector<1x8x8xf32>
    %19 = tpu.concatenate %15, %16, %17, %18 in 0 : vector<1x8x8xf32>, vector<1x8x8xf32>, vector<1x8x8xf32>, vector<1x8x8xf32> -> vector<4x8x8xf32>
    %20 = arith.truncf %19 : vector<4x8x8xf32> to vector<4x8x8xbf16>
    %c0_7 = arith.constant 0 : index
    %c0_8 = arith.constant 0 : index
    %c0_9 = arith.constant 0 : index
    %21 = vector.load %arg14[%c0_7, %c0_8, %c0_9] : memref<4x8x8xbf16, #tpu.memory_space<vmem>>, vector<4x8x8xbf16>
    %c0_10 = arith.constant 0 : index
    %c0_11 = arith.constant 0 : index
    %c0_12 = arith.constant 0 : index
    %22 = vector.load %arg15[%c0_10, %c0_11, %c0_12] : memref<4x8x8xbf16, #tpu.memory_space<vmem>>, vector<4x8x8xbf16>
    %cst_13 = arith.constant dense<0.000000e+00> : vector<4x8x8xf32>
    %23 = tpu.matmul %20, %21, %cst_13 {dimension_numbers = #tpu.dot_dimension_numbers<[2], [2], [1], [1], [0, 0, 0, 1, 1, 1], [0], [0]>} : vector<4x8x8xbf16>, vector<4x8x8xbf16>, vector<4x8x8xf32> -> vector<4x8x8xf32>
    %cst_14 = arith.constant -1.000000e+04 : f32
    %cst_15 = arith.constant 1.000000e+04 : f32
    %24 = vector.broadcast %cst_14 : f32 to vector<4x8x8xf32>
    %25 = arith.maximumf %24, %23 : vector<4x8x8xf32>
    %26 = vector.broadcast %cst_15 : f32 to vector<4x8x8xf32>
    %27 = arith.minimumf %26, %25 : vector<4x8x8xf32>
    %c0_16 = arith.constant 0 : index
    %c0_17 = arith.constant 0 : index
    %c0_18 = arith.constant 0 : index
    %c0_19 = arith.constant 0 : index
    %28 = vector.load %arg4[%c0_16, %c0_17, %c0_18, %c0_19] : memref<1x1x1x8xf32, #tpu.memory_space<vmem>>, vector<1x1x1x8xf32>
    %29 = vector.shape_cast %28 : vector<1x1x1x8xf32> to vector<1x8xf32>
    %30 = vector.shape_cast %29 : vector<1x8xf32> to vector<1x1x8xf32>
    %31 = vector.broadcast %30 : vector<1x1x8xf32> to vector<4x8x8xf32>
    %32 = arith.addf %27, %31 : vector<4x8x8xf32>
    %cst_20 = arith.constant dense<0xFF800000> : vector<4x8xf32>
    %33 = vector.multi_reduction <maximumf>, %32, %cst_20 [2] : vector<4x8x8xf32> to vector<4x8xf32>
    %34 = vector.shape_cast %33 : vector<4x8xf32> to vector<4x8x1xf32>
    %35 = vector.broadcast %34 : vector<4x8x1xf32> to vector<4x8x8xf32>
    %36 = arith.subf %32, %35 : vector<4x8x8xf32>
    %37 = math.exp %36 : vector<4x8x8xf32>
    %cst_21 = arith.constant dense<0.000000e+00> : vector<4x8xf32>
    %38 = vector.multi_reduction <add>, %37, %cst_21 [2] : vector<4x8x8xf32> to vector<4x8xf32>
    %39 = vector.shape_cast %38 : vector<4x8xf32> to vector<4x8x1xf32>
    %40 = arith.truncf %37 : vector<4x8x8xf32> to vector<4x8x8xbf16>
    %cst_22 = arith.constant dense<0.000000e+00> : vector<4x8x8xf32>
    %41 = tpu.matmul %40, %22, %cst_22 {dimension_numbers = #tpu.dot_dimension_numbers<[2], [1], [1], [2], [0, 0, 0, 1, 1, 2], [0], [0]>} : vector<4x8x8xbf16>, vector<4x8x8xbf16>, vector<4x8x8xf32> -> vector<4x8x8xf32>
    %42 = tpu.reciprocal %39 {approx = true} : vector<4x8x1xf32> -> vector<4x8x1xf32>
    %43 = vector.broadcast %42 : vector<4x8x1xf32> to vector<4x8x8xf32>
    %44 = arith.mulf %41, %43 : vector<4x8x8xf32>
    %45 = vector.extract_strided_slice %44 {offsets = [0, 0, 0], sizes = [1, 8, 8], strides = [1, 1, 1]} : vector<4x8x8xf32> to vector<1x8x8xf32>
    %46 = vector.shape_cast %45 : vector<1x8x8xf32> to vector<8x8xf32>
    %47 = vector.extract_strided_slice %44 {offsets = [1, 0, 0], sizes = [1, 8, 8], strides = [1, 1, 1]} : vector<4x8x8xf32> to vector<1x8x8xf32>
    %48 = vector.shape_cast %47 : vector<1x8x8xf32> to vector<8x8xf32>
    %49 = vector.extract_strided_slice %44 {offsets = [2, 0, 0], sizes = [1, 8, 8], strides = [1, 1, 1]} : vector<4x8x8xf32> to vector<1x8x8xf32>
    %50 = vector.shape_cast %49 : vector<1x8x8xf32> to vector<8x8xf32>
    %51 = vector.extract_strided_slice %44 {offsets = [3, 0, 0], sizes = [1, 8, 8], strides = [1, 1, 1]} : vector<4x8x8xf32> to vector<1x8x8xf32>
    %52 = vector.shape_cast %51 : vector<1x8x8xf32> to vector<8x8xf32>
    %53 = tpu.concatenate %46, %48, %50, %52 in 1 : vector<8x8xf32>, vector<8x8xf32>, vector<8x8xf32>, vector<8x8xf32> -> vector<8x32xf32>
    %54 = arith.truncf %53 : vector<8x32xf32> to vector<8x32xbf16>
    %c0_23 = arith.constant 0 : index
    %c0_24 = arith.constant 0 : index
    %55 = vector.load %arg9[%c0_23, %c0_24] : memref<32x32xbf16, #tpu.memory_space<vmem>>, vector<32x32xbf16>
    %cst_25 = arith.constant dense<0.000000e+00> : vector<8x32xf32>
    %56 = tpu.matmul %54, %55, %cst_25 {dimension_numbers = #tpu.dot_dimension_numbers<[1], [0], [0], [1], [0, 0, 1, 1], [], []>} : vector<8x32xbf16>, vector<32x32xbf16>, vector<8x32xf32> -> vector<8x32xf32>
    %c0_26 = arith.constant 0 : index
    %c0_27 = arith.constant 0 : index
    %57 = vector.load %arg10[%c0_26, %c0_27] : memref<1x32xf32, #tpu.memory_space<vmem>>, vector<1x32xf32>
    %58 = vector.broadcast %57 : vector<1x32xf32> to vector<8x32xf32>
    %59 = arith.addf %56, %58 : vector<8x32xf32>
    %60 = arith.addf %59, %4 : vector<8x32xf32>
    %cst_28 = arith.constant dense<0.000000e+00> : vector<8xf32>
    %61 = vector.multi_reduction <add>, %60, %cst_28 [1] : vector<8x32xf32> to vector<8xf32>
    %62 = vector.shape_cast %61 : vector<8xf32> to vector<8x1xf32>
    %cst_29 = arith.constant 3.200000e+01 : f32
    %63 = vector.broadcast %cst_29 : f32 to vector<8x1xf32>
    %64 = arith.divf %62, %63 : vector<8x1xf32>
    %65 = vector.broadcast %64 : vector<8x1xf32> to vector<8x32xf32>
    %66 = arith.subf %60, %65 : vector<8x32xf32>
    %67 = arith.mulf %66, %66 : vector<8x32xf32>
    %cst_30 = arith.constant dense<0.000000e+00> : vector<8xf32>
    %68 = vector.multi_reduction <add>, %67, %cst_30 [1] : vector<8x32xf32> to vector<8xf32>
    %69 = vector.shape_cast %68 : vector<8xf32> to vector<8x1xf32>
    %cst_31 = arith.constant 3.200000e+01 : f32
    %70 = vector.broadcast %cst_31 : f32 to vector<8x1xf32>
    %71 = arith.divf %69, %70 : vector<8x1xf32>
    %c0_32 = arith.constant 0 : index
    %c0_33 = arith.constant 0 : index
    %72 = vector.load %arg11[%c0_32, %c0_33] : memref<1x32xf32, #tpu.memory_space<vmem>>, vector<1x32xf32>
    %cst_34 = arith.constant 9.99999996E-13 : f32
    %73 = vector.broadcast %cst_34 : f32 to vector<8x1xf32>
    %74 = arith.addf %71, %73 : vector<8x1xf32>
    %75 = math.rsqrt %74 : vector<8x1xf32>
    %76 = vector.broadcast %75 : vector<8x1xf32> to vector<8x32xf32>
    %77 = arith.mulf %66, %76 : vector<8x32xf32>
    %78 = vector.broadcast %72 : vector<1x32xf32> to vector<8x32xf32>
    %79 = arith.mulf %78, %77 : vector<8x32xf32>
    %c0_35 = arith.constant 0 : index
    %c0_36 = arith.constant 0 : index
    %80 = vector.load %arg12[%c0_35, %c0_36] : memref<1x32xf32, #tpu.memory_space<vmem>>, vector<1x32xf32>
    %81 = vector.broadcast %80 : vector<1x32xf32> to vector<8x32xf32>
    %82 = arith.addf %79, %81 : vector<8x32xf32>
    %c0_37 = arith.constant 0 : index
    %c0_38 = arith.constant 0 : index
    %c0_39 = arith.constant 0 : index
    %83 = vector.load %arg13[%c0_37, %c0_38, %c0_39] : memref<1x8x32xf32, #tpu.memory_space<vmem>>, vector<1x8x32xf32>
    %84 = vector.shape_cast %83 : vector<1x8x32xf32> to vector<8x32xf32>
    %85 = vector.shape_cast %82 : vector<8x32xf32> to vector<1x8x32xf32>
    tpu.vector_store %arg13[%c0_37, %c0_38, %c0_39], %85 {strides = array<i32>} : memref<1x8x32xf32, #tpu.memory_space<vmem>>, vector<1x8x32xf32>,
    return
  }
  func.func @transform_0(%arg0: i32, %arg1: i32) -> (i32, i32, i32) {
    %c0_i32 = arith.constant 0 : i32
    %c0_i32_0 = arith.constant 0 : i32
    return %arg0, %arg1, %c0_i32 : i32, i32, i32
  }
  func.func @transform_1(%arg0: i32, %arg1: i32) -> (i32, i32, i32) {
    %c0_i32 = arith.constant 0 : i32
    %c0_i32_0 = arith.constant 0 : i32
    %c0_i32_1 = arith.constant 0 : i32
    return %arg0, %c0_i32, %c0_i32_0 : i32, i32, i32
  }
  func.func @transform_2(%arg0: i32, %arg1: i32) -> (i32, i32, i32, i32) {
    %c0_i32 = arith.constant 0 : i32
    %c0_i32_0 = arith.constant 0 : i32
    %c0_i32_1 = arith.constant 0 : i32
    %c0_i32_2 = arith.constant 0 : i32
    return %arg0, %c0_i32, %c0_i32_0, %c0_i32_1 : i32, i32, i32, i32
  }
  func.func @transform_3(%arg0: i32, %arg1: i32) -> (i32, i32) {
    %c0_i32 = arith.constant 0 : i32
    %c0_i32_0 = arith.constant 0 : i32
    %c0_i32_1 = arith.constant 0 : i32
    return %c0_i32, %c0_i32_0 : i32, i32
  }
  func.func @transform_4(%arg0: i32, %arg1: i32) -> (i32, i32) {
    %c0_i32 = arith.constant 0 : i32
    %c0_i32_0 = arith.constant 0 : i32
    %c0_i32_1 = arith.constant 0 : i32
    return %c0_i32, %c0_i32_0 : i32, i32
  }
  func.func @transform_5(%arg0: i32, %arg1: i32) -> (i32, i32) {
    %c0_i32 = arith.constant 0 : i32
    %c0_i32_0 = arith.constant 0 : i32
    %c0_i32_1 = arith.constant 0 : i32
    return %c0_i32, %c0_i32_0 : i32, i32
  }
  func.func @transform_6(%arg0: i32, %arg1: i32) -> (i32, i32) {
    %c0_i32 = arith.constant 0 : i32
    %c0_i32_0 = arith.constant 0 : i32
    %c0_i32_1 = arith.constant 0 : i32
    return %c0_i32, %c0_i32_0 : i32, i32
  }
  func.func @transform_7(%arg0: i32, %arg1: i32) -> (i32, i32) {
    %c0_i32 = arith.constant 0 : i32
    %c0_i32_0 = arith.constant 0 : i32
    %c0_i32_1 = arith.constant 0 : i32
    return %c0_i32, %c0_i32_0 : i32, i32
  }
  func.func @transform_8(%arg0: i32, %arg1: i32) -> (i32, i32) {
    %c0_i32 = arith.constant 0 : i32
    %c0_i32_0 = arith.constant 0 : i32
    %c0_i32_1 = arith.constant 0 : i32
    return %c0_i32, %c0_i32_0 : i32, i32
  }
  func.func @transform_9(%arg0: i32, %arg1: i32) -> (i32, i32) {
    %c0_i32 = arith.constant 0 : i32
    %c0_i32_0 = arith.constant 0 : i32
    %c0_i32_1 = arith.constant 0 : i32
    return %c0_i32, %c0_i32_0 : i32, i32
  }
  func.func @transform_10(%arg0: i32, %arg1: i32) -> (i32, i32) {
    %c0_i32 = arith.constant 0 : i32
    %c0_i32_0 = arith.constant 0 : i32
    %c0_i32_1 = arith.constant 0 : i32
    return %c0_i32, %c0_i32_0 : i32, i32
  }
  func.func @transform_11(%arg0: i32, %arg1: i32) -> (i32, i32, i32) {
    %c0_i32 = arith.constant 0 : i32
    %c0_i32_0 = arith.constant 0 : i32
    return %arg0, %arg1, %c0_i32 : i32, i32, i32
  }
}

</mosaic_0001>

<llo_original>
// kernel: tpu_custom_call.1
$region0: #{tpu_custom_call.1}
  #allocation0 [shape = 'u32[]', space=smem, size = 0x4, offset = 0x4, fixed_abs, tag = 'smem constant byte address 0x4 - core index']
  #allocation1 [shape = 'u32[72,128]{1,0:T(1,128)}', space=vmem, size = 0x9000, scoped, tag = 'internal scratch']
  #allocation2 [shape = 'bf16[4,8,8]{2,1,0:T(8,128)(2,1)}', space=vmem, size = 0x2000, scoped, tag = 'scratch operand']
  #allocation3 [shape = 'bf16[4,8,8]{2,1,0:T(8,128)(2,1)}', space=vmem, size = 0x2000, scoped, tag = 'scratch operand']
  %s0 = inlined_call_operand.hbm [shape: f32[2,8,32], index: 0, kind: input, shape index: {}]
  %s1 = inlined_call_operand.hbm [shape: bf16[2,8,32], index: 1, kind: input, shape index: {}]
  %s2 = inlined_call_operand.hbm [shape: f32[2,1,1,8], index: 2, kind: input, shape index: {}]
  %s3 = inlined_call_operand.hbm [shape: bf16[32,32], index: 3, kind: input, shape index: {}]
  %s4 = inlined_call_operand.vmem [shape: f32[1,32], index: 4, kind: input, shape index: {}]
  %s5 = inlined_call_operand.hbm [shape: bf16[32,64], index: 5, kind: input, shape index: {}]
  %s6 = inlined_call_operand.vmem [shape: f32[1,64], index: 6, kind: input, shape index: {}]
  %s7 = inlined_call_operand.hbm [shape: bf16[32,32], index: 7, kind: input, shape index: {}]
  %s8 = inlined_call_operand.vmem [shape: f32[1,32], index: 8, kind: input, shape index: {}]
  %s9 = inlined_call_operand.vmem [shape: f32[1,32], index: 9, kind: input, shape index: {}]
  %s10 = inlined_call_operand.vmem [shape: f32[1,32], index: 10, kind: input, shape index: {}]
  %s11 = inlined_call_operand.hbm [shape: f32[2,8,32], index: 11, kind: output, shape index: {}]
  %s12 = sld [smem:[#allocation0]]
  $region105: #{tpu_custom_call.1} parent=0
    _
  %s14 = ssub.s32 1, %s12
  %s15 = scalar_select 0, %s14, %s12
  $region1: #{tpu_custom_call.1} parent=0
    #allocation4 [shape = 'u8[8192]{0}', space=vmem, size = 0x2000, scoped, tag = 'input window, operand 0']
    #allocation5 [shape = 's32[2]{0}', space=sflag, size = 0x8, scoped, tag = 'scoped memory for tpu_custom_call.1']
    #allocation6 [shape = 's32[2]{0}', space=sflag, size = 0x8, scoped, tag = 'scoped memory for tpu_custom_call.1']
    #allocation7 [shape = 'u8[4096]{0}', space=vmem, size = 0x1000, scoped, tag = 'input window, operand 1']
    #allocation8 [shape = 's32[2]{0}', space=sflag, size = 0x8, scoped, tag = 'scoped memory for tpu_custom_call.1']
    #allocation9 [shape = 'u8[1024]{0}', space=vmem, size = 0x400, scoped, tag = 'input window, operand 2']
    #allocation10 [shape = 'u8[8192]{0}', space=vmem, size = 0x2000, scoped, tag = 'input window, operand 3, single buffered']
    #allocation11 [shape = 's32[1]{0}', space=sflag, size = 0x4, scoped, tag = 'scoped memory for tpu_custom_call.1']
    #allocation12 [shape = 'u8[8192]{0}', space=vmem, size = 0x2000, scoped, tag = 'input window, operand 5, single buffered']
    #allocation13 [shape = 'u8[8192]{0}', space=vmem, size = 0x2000, scoped, tag = 'input window, operand 7, single buffered']
    #allocation14 [shape = 's32[1]{0}', space=sflag, size = 0x4, scoped, tag = 'scoped memory for tpu_custom_call.1']
    #allocation15 [shape = 'u8[8192]{0}', space=vmem, size = 0x2000, scoped, tag = 'output window, operand 0']
    %16 = vsyncpa [#allocation5], 0
    %s17 = scalar_lea.sflag [#allocation5], 1
    %18 = vsyncpa %s17, 0
    %19 = vsyncpa [#allocation8], 0
    %s20 = scalar_lea.sflag [#allocation8], 1
    %21 = vsyncpa %s20, 0
    %22 = vsyncpa [#allocation11], 0
    %23 = vsyncpa [#allocation14], 0
    %24 = vsyncpa [#allocation6], 0
    %s25 = scalar_lea.sflag [#allocation6], 1
    %26 = vsyncpa %s25, 0
    loop: start=0, step=1, limit=4
    $region2: #{tpu_custom_call.1} parent=1 // loop_pre_header
      _
    $region3: #{tpu_custom_call.1} parent=1 // loop_header
      %s28 = sphi 0, %s32
      %p29 = scmp.ge.s32.totalorder %s28, 4
      %s35 = sphi 0, %s47
      %s36 = sphi 0, %s43
      %s37 = sphi 0, %s35
      %s38 = sphi 0, %s36
      %s39 = sphi 0, %s37
      %s40 = sphi 0, %s38
      %s52 = sphi 0, %s54
      %s55 = sphi 0, %s52
      %s56 = sphi 0, %s55
      %s72 = sphi 0, %s56
      %s78 = sphi 0, %s80
      %s81 = sphi 0, %s78
      %s82 = sphi 0, %s81
      %s98 = sphi 0, %s82
      %s104 = sphi 0, %s106
      %s107 = sphi 0, %s104
      %s108 = sphi 0, %s107
      %s124 = sphi 0, %s108
      %s128 = sphi 0, %s128
      %s130 = sphi 0, %s128
      %s131 = sphi 0, %s130
      %s145 = sphi 0, %s131
      %s149 = sphi 0, %s149
      %s151 = sphi 0, %s149
      %s152 = sphi 0, %s151
      %s166 = sphi 0, %s152
      %s170 = sphi 0, %s170
      %s172 = sphi 0, %s170
      %s173 = sphi 0, %s172
      %s187 = sphi 0, %s173
      %s191 = sphi 0, %s191
      %s193 = sphi 0, %s191
      %s194 = sphi 0, %s193
      %s208 = sphi 0, %s194
      %s212 = sphi 0, %s212
      %s214 = sphi 0, %s212
      %s215 = sphi 0, %s214
      %s229 = sphi 0, %s215
      %s233 = sphi 0, %s233
      %s235 = sphi 0, %s233
      %s236 = sphi 0, %s235
      %s250 = sphi 0, %s236
      %s254 = sphi 0, %s254
      %s256 = sphi 0, %s254
      %s257 = sphi 0, %s256
      %s271 = sphi 0, %s257
      %s275 = sphi 0, %s275
      %s277 = sphi 0, %s275
      %s278 = sphi 0, %s277
      %s292 = sphi 0, %s278
      %s300 = sphi 0, %s302
      %s303 = sphi 0, %s300
      %s304 = sphi 0, %s303
      %s320 = sphi 0, %s304
    $region4: #{tpu_custom_call.1} parent=1 // loop_header_branch
      %31 = sbr.rel (%p29) target = $region8
    $region5: #{tpu_custom_call.1} parent=1 // loop_body
      %s33 = ssub.s32 %s28, 1
      %s34 = ssub.s32 %s28, 2
      %s41 = sadd.s32 1, %s36
      %p42 = scmp.ge.s32.totalorder %s41, 1
      %s43 = scalar_select %p42, 0, %s41
      %s44 = sadd.s32 1, %s35
      %s45 = scalar_select %p42, %s44, %s35
      %p46 = scmp.ge.s32.totalorder %s45, 2
      %s47 = scalar_select %p46, 0, %s45
      %s48 = ssub.s32 %s35, %s47
      %s49 = ssub.s32 %s36, %s43
      %s50 = sor.u32 %s48, %s49
      %p51 = scmp.eq.s32.totalorder %s50, 0
      %s53 = sadd.s32 %s52, 1
      %s54 = scalar_select %p51, %s52, %s53
      %p57 = pneg %p51
      %p58 = scmp.eq.s32.totalorder %s28, 1
      %p59 = por %p57, %p58
      %p60 = scmp.ne.s32.totalorder %s52, %s55
      %p61 = scmp.eq.s32.totalorder %s28, 0
      %p62 = por %p60, %p61
      %p63 = scmp.ne.s32.totalorder %s52, %s55
      %p64 = scmp.eq.s32.totalorder %s33, 1
      %p65 = por %p63, %p64
      %p66 = scmp.ne.s32.totalorder %s55, %s56
      %p67 = scmp.eq.s32.totalorder %s33, 0
      %p68 = por %p66, %p67
      %p69 = scmp.ne.s32.totalorder %s55, %s56
      %p70 = scmp.eq.s32.totalorder %s34, 1
      %p71 = por %p69, %p70
      %p73 = scmp.ne.s32.totalorder %s56, %s72
      %p74 = scmp.eq.s32.totalorder %s34, 0
      %p75 = por %p73, %p74
      %s76 = ssub.s32 %s35, %s47
      %p77 = scmp.eq.s32.totalorder %s76, 0
      %s79 = sadd.s32 %s78, 1
      %s80 = scalar_select %p77, %s78, %s79
      %p83 = pneg %p77
      %p84 = scmp.eq.s32.totalorder %s28, 1
      %p85 = por %p83, %p84
      %p86 = scmp.ne.s32.totalorder %s78, %s81
      %p87 = scmp.eq.s32.totalorder %s28, 0
      %p88 = por %p86, %p87
      %p89 = scmp.ne.s32.totalorder %s78, %s81
      %p90 = scmp.eq.s32.totalorder %s33, 1
      %p91 = por %p89, %p90
      %p92 = scmp.ne.s32.totalorder %s81, %s82
      %p93 = scmp.eq.s32.totalorder %s33, 0
      %p94 = por %p92, %p93
      %p95 = scmp.ne.s32.totalorder %s81, %s82
      %p96 = scmp.eq.s32.totalorder %s34, 1
      %p97 = por %p95, %p96
      %p99 = scmp.ne.s32.totalorder %s82, %s98
      %p100 = scmp.eq.s32.totalorder %s34, 0
      %p101 = por %p99, %p100
      %s102 = ssub.s32 %s35, %s47
      %p103 = scmp.eq.s32.totalorder %s102, 0
      %s105 = sadd.s32 %s104, 1
      %s106 = scalar_select %p103, %s104, %s105
      %p109 = pneg %p103
      %p110 = scmp.eq.s32.totalorder %s28, 1
      %p111 = por %p109, %p110
      %p112 = scmp.ne.s32.totalorder %s104, %s107
      %p113 = scmp.eq.s32.totalorder %s28, 0
      %p114 = por %p112, %p113
      %p115 = scmp.ne.s32.totalorder %s104, %s107
      %p116 = scmp.eq.s32.totalorder %s33, 1
      %p117 = por %p115, %p116
      %p118 = scmp.ne.s32.totalorder %s107, %s108
      %p119 = scmp.eq.s32.totalorder %s33, 0
      %p120 = por %p118, %p119
      %p121 = scmp.ne.s32.totalorder %s107, %s108
      %p122 = scmp.eq.s32.totalorder %s34, 1
      %p123 = por %p121, %p122
      %p125 = scmp.ne.s32.totalorder %s108, %s124
      %p126 = scmp.eq.s32.totalorder %s34, 0
      %p127 = por %p125, %p126
      %s129 = sadd.s32 %s128, 1
      %p132 = scmp.eq.s32.totalorder %s28, 1
      %p133 = scmp.ne.s32.totalorder %s128, %s130
      %p134 = scmp.eq.s32.totalorder %s28, 0
      %p135 = por %p133, %p134
      %p136 = scmp.ne.s32.totalorder %s128, %s130
      %p137 = scmp.eq.s32.totalorder %s33, 1
      %p138 = por %p136, %p137
      %p139 = scmp.ne.s32.totalorder %s130, %s131
      %p140 = scmp.eq.s32.totalorder %s33, 0
      %p141 = por %p139, %p140
      %p142 = scmp.ne.s32.totalorder %s130, %s131
      %p143 = scmp.eq.s32.totalorder %s34, 1
      %p144 = por %p142, %p143
      %p146 = scmp.ne.s32.totalorder %s131, %s145
      %p147 = scmp.eq.s32.totalorder %s34, 0
      %p148 = por %p146, %p147
      %s150 = sadd.s32 %s149, 1
      %p153 = scmp.eq.s32.totalorder %s28, 1
      %p154 = scmp.ne.s32.totalorder %s149, %s151
      %p155 = scmp.eq.s32.totalorder %s28, 0
      %p156 = por %p154, %p155
      %p157 = scmp.ne.s32.totalorder %s149, %s151
      %p158 = scmp.eq.s32.totalorder %s33, 1
      %p159 = por %p157, %p158
      %p160 = scmp.ne.s32.totalorder %s151, %s152
      %p161 = scmp.eq.s32.totalorder %s33, 0
      %p162 = por %p160, %p161
      %p163 = scmp.ne.s32.totalorder %s151, %s152
      %p164 = scmp.eq.s32.totalorder %s34, 1
      %p165 = por %p163, %p164
      %p167 = scmp.ne.s32.totalorder %s152, %s166
      %p168 = scmp.eq.s32.totalorder %s34, 0
      %p169 = por %p167, %p168
      %s171 = sadd.s32 %s170, 1
      %p174 = scmp.eq.s32.totalorder %s28, 1
      %p175 = scmp.ne.s32.totalorder %s170, %s172
      %p176 = scmp.eq.s32.totalorder %s28, 0
      %p177 = por %p175, %p176
      %p178 = scmp.ne.s32.totalorder %s170, %s172
      %p179 = scmp.eq.s32.totalorder %s33, 1
      %p180 = por %p178, %p179
      %p181 = scmp.ne.s32.totalorder %s172, %s173
      %p182 = scmp.eq.s32.totalorder %s33, 0
      %p183 = por %p181, %p182
      %p184 = scmp.ne.s32.totalorder %s172, %s173
      %p185 = scmp.eq.s32.totalorder %s34, 1
      %p186 = por %p184, %p185
      %p188 = scmp.ne.s32.totalorder %s173, %s187
      %p189 = scmp.eq.s32.totalorder %s34, 0
      %p190 = por %p188, %p189
      %s192 = sadd.s32 %s191, 1
      %p195 = scmp.eq.s32.totalorder %s28, 1
      %p196 = scmp.ne.s32.totalorder %s191, %s193
      %p197 = scmp.eq.s32.totalorder %s28, 0
      %p198 = por %p196, %p197
      %p199 = scmp.ne.s32.totalorder %s191, %s193
      %p200 = scmp.eq.s32.totalorder %s33, 1
      %p201 = por %p199, %p200
      %p202 = scmp.ne.s32.totalorder %s193, %s194
      %p203 = scmp.eq.s32.totalorder %s33, 0
      %p204 = por %p202, %p203
      %p205 = scmp.ne.s32.totalorder %s193, %s194
      %p206 = scmp.eq.s32.totalorder %s34, 1
      %p207 = por %p205, %p206
      %p209 = scmp.ne.s32.totalorder %s194, %s208
      %p210 = scmp.eq.s32.totalorder %s34, 0
      %p211 = por %p209, %p210
      %s213 = sadd.s32 %s212, 1
      %p216 = scmp.eq.s32.totalorder %s28, 1
      %p217 = scmp.ne.s32.totalorder %s212, %s214
      %p218 = scmp.eq.s32.totalorder %s28, 0
      %p219 = por %p217, %p218
      %p220 = scmp.ne.s32.totalorder %s212, %s214
      %p221 = scmp.eq.s32.totalorder %s33, 1
      %p222 = por %p220, %p221
      %p223 = scmp.ne.s32.totalorder %s214, %s215
      %p224 = scmp.eq.s32.totalorder %s33, 0
      %p225 = por %p223, %p224
      %p226 = scmp.ne.s32.totalorder %s214, %s215
      %p227 = scmp.eq.s32.totalorder %s34, 1
      %p228 = por %p226, %p227
      %p230 = scmp.ne.s32.totalorder %s215, %s229
      %p231 = scmp.eq.s32.totalorder %s34, 0
      %p232 = por %p230, %p231
      %s234 = sadd.s32 %s233, 1
      %p237 = scmp.eq.s32.totalorder %s28, 1
      %p238 = scmp.ne.s32.totalorder %s233, %s235
      %p239 = scmp.eq.s32.totalorder %s28, 0
      %p240 = por %p238, %p239
      %p241 = scmp.ne.s32.totalorder %s233, %s235
      %p242 = scmp.eq.s32.totalorder %s33, 1
      %p243 = por %p241, %p242
      %p244 = scmp.ne.s32.totalorder %s235, %s236
      %p245 = scmp.eq.s32.totalorder %s33, 0
      %p246 = por %p244, %p245
      %p247 = scmp.ne.s32.totalorder %s235, %s236
      %p248 = scmp.eq.s32.totalorder %s34, 1
      %p249 = por %p247, %p248
      %p251 = scmp.ne.s32.totalorder %s236, %s250
      %p252 = scmp.eq.s32.totalorder %s34, 0
      %p253 = por %p251, %p252
      %s255 = sadd.s32 %s254, 1
      %p258 = scmp.eq.s32.totalorder %s28, 1
      %p259 = scmp.ne.s32.totalorder %s254, %s256
      %p260 = scmp.eq.s32.totalorder %s28, 0
      %p261 = por %p259, %p260
      %p262 = scmp.ne.s32.totalorder %s254, %s256
      %p263 = scmp.eq.s32.totalorder %s33, 1
      %p264 = por %p262, %p263
      %p265 = scmp.ne.s32.totalorder %s256, %s257
      %p266 = scmp.eq.s32.totalorder %s33, 0
      %p267 = por %p265, %p266
      %p268 = scmp.ne.s32.totalorder %s256, %s257
      %p269 = scmp.eq.s32.totalorder %s34, 1
      %p270 = por %p268, %p269
      %p272 = scmp.ne.s32.totalorder %s257, %s271
      %p273 = scmp.eq.s32.totalorder %s34, 0
      %p274 = por %p272, %p273
      %s276 = sadd.s32 %s275, 1
      %p279 = scmp.eq.s32.totalorder %s28, 1
      %p280 = scmp.ne.s32.totalorder %s275, %s277
      %p281 = scmp.eq.s32.totalorder %s28, 0
      %p282 = por %p280, %p281
      %p283 = scmp.ne.s32.totalorder %s275, %s277
      %p284 = scmp.eq.s32.totalorder %s33, 1
      %p285 = por %p283, %p284
      %p286 = scmp.ne.s32.totalorder %s277, %s278
      %p287 = scmp.eq.s32.totalorder %s33, 0
      %p288 = por %p286, %p287
      %p289 = scmp.ne.s32.totalorder %s277, %s278
      %p290 = scmp.eq.s32.totalorder %s34, 1
      %p291 = por %p289, %p290
      %p293 = scmp.ne.s32.totalorder %s278, %s292
      %p294 = scmp.eq.s32.totalorder %s34, 0
      %p295 = por %p293, %p294
      %s296 = ssub.s32 %s35, %s47
      %s297 = ssub.s32 %s36, %s43
      %s298 = sor.u32 %s296, %s297
      %p299 = scmp.eq.s32.totalorder %s298, 0
      %s301 = sadd.s32 %s300, 1
      %s302 = scalar_select %p299, %s300, %s301
      %p305 = pneg %p299
      %p306 = scmp.eq.s32.totalorder %s28, 1
      %p307 = por %p305, %p306
      %p308 = scmp.ne.s32.totalorder %s300, %s303
      %p309 = scmp.eq.s32.totalorder %s28, 0
      %p310 = por %p308, %p309
      %p311 = scmp.ne.s32.totalorder %s300, %s303
      %p312 = scmp.eq.s32.totalorder %s33, 1
      %p313 = por %p311, %p312
      %p314 = scmp.ne.s32.totalorder %s303, %s304
      %p315 = scmp.eq.s32.totalorder %s33, 0
      %p316 = por %p314, %p315
      %p317 = scmp.ne.s32.totalorder %s303, %s304
      %p318 = scmp.eq.s32.totalorder %s34, 1
      %p319 = por %p317, %p318
      %p321 = scmp.ne.s32.totalorder %s304, %s320
      %p322 = scmp.eq.s32.totalorder %s34, 0
      %p323 = por %p321, %p322
      %p324 = scmp.le.s32.totalorder 1, %s28
      %p325 = scmp.lt.s32.totalorder %s28, 3
      %p326 = pnand %p324, %p325
      %p327 = pneg %p326
      // Predicated region
      $region9: #{tpu_custom_call.1} parent=5 // pred_check
        _
      $region10: #{tpu_custom_call.1} parent=5 // pred_check_branch
        %329 = sbr.rel (%p326) target = $region12
      $region11: #{tpu_custom_call.1} parent=5 // pred_region
        %s330 = ssub.s32 %s28, 1
        // Predicated region
        $region13: #{tpu_custom_call.1} parent=11 // pred_check
          %p331 = pneg %p141
        $region14: #{tpu_custom_call.1} parent=11 // pred_check_branch
          %333 = sbr.rel (%p331) target = $region16
        $region15: #{tpu_custom_call.1} parent=11 // pred_region
          %335 = vsyncadd [#allocation11], 0
          %s336 = sshll.u32 %s3, 4
          %s337 = int_to_ptr.hbm [resolvable:$true] %s336
          %s338 = sshll.u32 [#allocation10], 4
          %s339 = int_to_ptr.vmem [resolvable:$true] %s338
          %344 = dma.hbm_to_vmem [thread:$0]  %s337, 256, %s339, [#allocation11], 64, 64, 4
        $region16: #{tpu_custom_call.1} parent=11 // pred_fallthru
          _
        // Predicated region
        $region17: #{tpu_custom_call.1} parent=11 // pred_check
          %p345 = pneg %p162
        $region18: #{tpu_custom_call.1} parent=11 // pred_check_branch
          %347 = sbr.rel (%p345) target = $region20
        $region19: #{tpu_custom_call.1} parent=11 // pred_region
          _
        $region20: #{tpu_custom_call.1} parent=11 // pred_fallthru
          _
        // Predicated region
        $region21: #{tpu_custom_call.1} parent=11 // pred_check
          %p348 = pneg %p183
        $region22: #{tpu_custom_call.1} parent=11 // pred_check_branch
          %350 = sbr.rel (%p348) target = $region24
        $region23: #{tpu_custom_call.1} parent=11 // pred_region
          %352 = vsyncadd [#allocation11], 0
          %s353 = sshll.u32 %s5, 4
          %s354 = int_to_ptr.hbm [resolvable:$true] %s353
          %s355 = sshll.u32 [#allocation12], 4
          %s356 = int_to_ptr.vmem [resolvable:$true] %s355
          %361 = dma.hbm_to_vmem [thread:$0]  %s354, 256, %s356, [#allocation11], 64, 64, 4
        $region24: #{tpu_custom_call.1} parent=11 // pred_fallthru
          _
        // Predicated region
        $region25: #{tpu_custom_call.1} parent=11 // pred_check
          %p362 = pneg %p204
        $region26: #{tpu_custom_call.1} parent=11 // pred_check_branch
          %364 = sbr.rel (%p362) target = $region28
        $region27: #{tpu_custom_call.1} parent=11 // pred_region
          _
        $region28: #{tpu_custom_call.1} parent=11 // pred_fallthru
          _
        // Predicated region
        $region29: #{tpu_custom_call.1} parent=11 // pred_check
          %p365 = pneg %p225
        $region30: #{tpu_custom_call.1} parent=11 // pred_check_branch
          %367 = sbr.rel (%p365) target = $region32
        $region31: #{tpu_custom_call.1} parent=11 // pred_region
          %369 = vsyncadd [#allocation14], 0
          %s370 = sshll.u32 %s7, 4
          %s371 = int_to_ptr.hbm [resolvable:$true] %s370
          %s372 = sshll.u32 [#allocation13], 4
          %s373 = int_to_ptr.vmem [resolvable:$true] %s372
          %378 = dma.hbm_to_vmem [thread:$0]  %s371, 256, %s373, [#allocation14], 64, 64, 4
        $region32: #{tpu_custom_call.1} parent=11 // pred_fallthru
          _
        // Predicated region
        $region33: #{tpu_custom_call.1} parent=11 // pred_check
          %p379 = pneg %p246
        $region34: #{tpu_custom_call.1} parent=11 // pred_check_branch
          %381 = sbr.rel (%p379) target = $region36
        $region35: #{tpu_custom_call.1} parent=11 // pred_region
          _
        $region36: #{tpu_custom_call.1} parent=11 // pred_fallthru
          _
        // Predicated region
        $region37: #{tpu_custom_call.1} parent=11 // pred_check
          %p382 = pneg %p267
        $region38: #{tpu_custom_call.1} parent=11 // pred_check_branch
          %384 = sbr.rel (%p382) target = $region40
        $region39: #{tpu_custom_call.1} parent=11 // pred_region
          _
        $region40: #{tpu_custom_call.1} parent=11 // pred_fallthru
          _
        // Predicated region
        $region41: #{tpu_custom_call.1} parent=11 // pred_check
          %p385 = pneg %p288
        $region42: #{tpu_custom_call.1} parent=11 // pred_check_branch
          %387 = sbr.rel (%p385) target = $region44
        $region43: #{tpu_custom_call.1} parent=11 // pred_region
          _
        $region44: #{tpu_custom_call.1} parent=11 // pred_fallthru
          _
      $region12: #{tpu_custom_call.1} parent=5 // pred_fallthru
        _
      %p388 = scmp.lt.s32.totalorder %s28, 2
      // Predicated region
      $region45: #{tpu_custom_call.1} parent=5 // pred_check
        %p389 = pneg %p388
      $region46: #{tpu_custom_call.1} parent=5 // pred_check_branch
        %391 = sbr.rel (%p389) target = $region48
      $region47: #{tpu_custom_call.1} parent=5 // pred_region
        // Predicated region
        $region49: #{tpu_custom_call.1} parent=47 // pred_check
          %p392 = pneg %p62
        $region50: #{tpu_custom_call.1} parent=47 // pred_check_branch
          %394 = sbr.rel (%p392) target = $region52
        $region51: #{tpu_custom_call.1} parent=47 // pred_region
          %s395 = sand.u32 %s52, 1
          %s396 = scalar_lea.sflag [#allocation5], %s395
          %s397 = sand.u32 %s52, 1
          %s398 = smul.addr %s397, 8
          %s399 = scalar_lea.vmem [#allocation4], %s398
          %401 = vsyncadd %s396, 0
          %s402 = sadd.s32 %s36, %s35
          %s403 = smul.addr %s402, 8
          %s404 = scalar_lea.hbm %s0, %s403
          %s406 = sshll.u32 %s404, 4
          %s407 = int_to_ptr.hbm [resolvable:$true] %s406
          %s408 = sshll.u32 %s399, 4
          %s409 = int_to_ptr.vmem [resolvable:$true] %s408
          %411 = dma.hbm_to_vmem [thread:$0]  %s407, 128, %s409, %s396
        $region52: #{tpu_custom_call.1} parent=47 // pred_fallthru
          _
        // Predicated region
        $region53: #{tpu_custom_call.1} parent=47 // pred_check
          %p412 = pneg %p88
        $region54: #{tpu_custom_call.1} parent=47 // pred_check_branch
          %414 = sbr.rel (%p412) target = $region56
        $region55: #{tpu_custom_call.1} parent=47 // pred_region
          %s415 = sand.u32 %s28, 1
          %s416 = scalar_lea.sflag [#allocation8], %s415
          %s417 = sand.u32 %s78, 1
          %s418 = smul.addr %s417, 4
          %s419 = scalar_lea.vmem [#allocation7], %s418
          %421 = vsyncadd %s416, 0
          %s422 = smul.addr %s35, 4
          %s423 = scalar_lea.hbm %s1, %s422
          %s425 = sshll.u32 %s423, 4
          %s426 = int_to_ptr.hbm [resolvable:$true] %s425
          %s427 = sshll.u32 %s419, 4
          %s428 = int_to_ptr.vmem [resolvable:$true] %s427
          %430 = dma.hbm_to_vmem [thread:$0]  %s426, 64, %s428, %s416
        $region56: #{tpu_custom_call.1} parent=47 // pred_fallthru
          _
        // Predicated region
        $region57: #{tpu_custom_call.1} parent=47 // pred_check
          %p431 = pneg %p114
        $region58: #{tpu_custom_call.1} parent=47 // pred_check_branch
          %433 = sbr.rel (%p431) target = $region60
        $region59: #{tpu_custom_call.1} parent=47 // pred_region
          %s434 = sand.u32 %s28, 1
          %s435 = scalar_lea.sflag [#allocation8], %s434
          %s436 = sand.u32 %s104, 1
          %s437 = scalar_lea.vmem [#allocation9], %s436
          %439 = vsyncadd %s435, 0
          %s440 = scalar_lea.hbm %s2, %s35
          %s442 = sshll.u32 %s440, 4
          %s443 = int_to_ptr.hbm [resolvable:$true] %s442
          %s444 = sshll.u32 %s437, 4
          %s445 = int_to_ptr.vmem [resolvable:$true] %s444
          %447 = dma.hbm_to_vmem [thread:$0]  %s443, 16, %s445, %s435
        $region60: #{tpu_custom_call.1} parent=47 // pred_fallthru
          _
      $region48: #{tpu_custom_call.1} parent=5 // pred_fallthru
        _
      %p448 = scmp.le.s32.totalorder 1, %s28
      %p449 = scmp.lt.s32.totalorder %s28, 3
      %p450 = pnand %p448, %p449
      %p451 = pneg %p450
      // Predicated region
      $region61: #{tpu_custom_call.1} parent=5 // pred_check
        _
      $region62: #{tpu_custom_call.1} parent=5 // pred_check_branch
        %453 = sbr.rel (%p450) target = $region64
      $region63: #{tpu_custom_call.1} parent=5 // pred_region
        %s454 = ssub.s32 %s28, 1
        %s455 = sand.u32 %s55, 1
        %s456 = scalar_lea.sflag [#allocation5], %s455
        %s457 = sand.u32 %s55, 1
        %s458 = smul.addr %s457, 8
        %s459 = scalar_lea.vmem [#allocation4], %s458
        // Predicated region
        $region65: #{tpu_custom_call.1} parent=63 // pred_check
          %p460 = pneg %p68
        $region66: #{tpu_custom_call.1} parent=63 // pred_check_branch
          %462 = sbr.rel (%p460) target = $region68
        $region67: #{tpu_custom_call.1} parent=63 // pred_region
          %464 = dma.done %s456, 128
        $region68: #{tpu_custom_call.1} parent=63 // pred_fallthru
          _
        %s465 = sand.u32 %s33, 1
        %s466 = scalar_lea.sflag [#allocation8], %s465
        %s467 = sand.u32 %s81, 1
        %s468 = smul.addr %s467, 4
        %s469 = scalar_lea.vmem [#allocation7], %s468
        // Predicated region
        $region69: #{tpu_custom_call.1} parent=63 // pred_check
          %p470 = pneg %p94
        $region70: #{tpu_custom_call.1} parent=63 // pred_check_branch
          %472 = sbr.rel (%p470) target = $region72
        $region71: #{tpu_custom_call.1} parent=63 // pred_region
          %474 = dma.done %s466, 64
        $region72: #{tpu_custom_call.1} parent=63 // pred_fallthru
          _
        %s475 = sand.u32 %s33, 1
        %s476 = scalar_lea.sflag [#allocation8], %s475
        %s477 = sand.u32 %s107, 1
        %s478 = scalar_lea.vmem [#allocation9], %s477
        // Predicated region
        $region73: #{tpu_custom_call.1} parent=63 // pred_check
          %p479 = pneg %p120
        $region74: #{tpu_custom_call.1} parent=63 // pred_check_branch
          %481 = sbr.rel (%p479) target = $region76
        $region75: #{tpu_custom_call.1} parent=63 // pred_region
          %483 = dma.done %s476, 16
        $region76: #{tpu_custom_call.1} parent=63 // pred_fallthru
          _
        // Predicated region
        $region77: #{tpu_custom_call.1} parent=63 // pred_check
          %p484 = pneg %p141
        $region78: #{tpu_custom_call.1} parent=63 // pred_check_branch
          %486 = sbr.rel (%p484) target = $region80
        $region79: #{tpu_custom_call.1} parent=63 // pred_region
          %488 = dma.done [#allocation11], 256
        $region80: #{tpu_custom_call.1} parent=63 // pred_fallthru
          _
        // Predicated region
        $region81: #{tpu_custom_call.1} parent=63 // pred_check
          %p489 = pneg %p183
        $region82: #{tpu_custom_call.1} parent=63 // pred_check_branch
          %491 = sbr.rel (%p489) target = $region84
        $region83: #{tpu_custom_call.1} parent=63 // pred_region
          %493 = dma.done [#allocation11], 256
        $region84: #{tpu_custom_call.1} parent=63 // pred_fallthru
          _
        // Predicated region
        $region85: #{tpu_custom_call.1} parent=63 // pred_check
          %p494 = pneg %p225
        $region86: #{tpu_custom_call.1} parent=63 // pred_check_branch
          %496 = sbr.rel (%p494) target = $region88
        $region87: #{tpu_custom_call.1} parent=63 // pred_region
          %498 = dma.done [#allocation14], 256
        $region88: #{tpu_custom_call.1} parent=63 // pred_fallthru
          _
        %s499 = sand.u32 %s55, 1
        %s500 = scalar_lea.sflag [#allocation5], %s499
        %s501 = sand.u32 %s55, 1
        %s502 = smul.addr %s501, 8
        %s503 = scalar_lea.vmem [#allocation4], %s502
        %p504 = pneg %p68
        %p505 = pneg %p65
        %s506 = sand.u32 %s33, 1
        %s507 = scalar_lea.sflag [#allocation8], %s506
        %s508 = sand.u32 %s81, 1
        %s509 = smul.addr %s508, 4
        %s510 = scalar_lea.vmem [#allocation7], %s509
        %p511 = pneg %p94
        %p512 = pneg %p91
        %s513 = sand.u32 %s33, 1
        %s514 = scalar_lea.sflag [#allocation8], %s513
        %s515 = sand.u32 %s107, 1
        %s516 = scalar_lea.vmem [#allocation9], %s515
        %p517 = pneg %p120
        %p518 = pneg %p117
        %p519 = pneg %p141
        %p520 = pneg %p138
        %p521 = pneg %p162
        %p522 = pneg %p159
        %p523 = pneg %p183
        %p524 = pneg %p180
        %p525 = pneg %p204
        %p526 = pneg %p201
        %p527 = pneg %p225
        %p528 = pneg %p222
        %p529 = pneg %p246
        %p530 = pneg %p243
        %p531 = pneg %p267
        %p532 = pneg %p264
        %p533 = pneg %p288
        %p534 = pneg %p285
        %p535 = pneg %p316
        %p536 = pneg %p313
        %s537 = sand.u32 %s303, 1
        %s538 = scalar_lea.sflag [#allocation6], %s537
        %s539 = sand.u32 %s303, 1
        %s540 = smul.addr %s539, 8
        %s541 = scalar_lea.vmem [#allocation15], %s540
        %p543 = scmp.eq.s32.totalorder %s38, 0
        // Predicated region
        $region89: #{tpu_custom_call.1} parent=63 // pred_check
          %p544 = pneg %p543
        $region90: #{tpu_custom_call.1} parent=63 // pred_check_branch
          %546 = sbr.rel (%p544) target = $region92
        $region91: #{tpu_custom_call.1} parent=63 // pred_region
          %v547 = vld [vmem:[%s469] sm:$0xf]
          %v548 = vld [vmem:[#allocation12] sm:$0xf]
          %v549 = vld [vmem:[#allocation12 + $0x4] sm:$0xf]
          %v550 = vld [vmem:[#allocation12 + $0x8] sm:$0xf]
          %v551 = vld [vmem:[#allocation12 + $0xc] sm:$0xf]
          %v552 = vld [vmem:[%s6] sm:$0x1]
          %v554 = vperm.slane %v552, 0
          %v560 = vunpack.c.l.b16 %v548
          %v561 = vunpack.c.l.b16 %v549
          %v562 = vunpack.c.l.b16 %v550
          %v563 = vunpack.c.l.b16 %v551
          %v564 = vpack.c.b16 %v561, %v560
          %v565 = vpack.c.b16 %v563, %v562
          %vm568 = vcmask 261120
          %v570 = vsel %vm568, %v547, 0
          %572 = vmatpush.bf16.msra.mxu0 0
          %573 = vmatpush.bf16.msra.mxu0 0
          %574 = vmatpush.bf16.msra.mxu0 0
          %575 = vmatpush.bf16.msra.mxu0 0
          %576 = vmatpush.bf16.msra.mxu0 0
          %577 = vmatpush.bf16.msra.mxu0 0
          %578 = vmatpush.bf16.msra.mxu0 %v565
          %579 = vmatpush.bf16.msra.mxu0 %v564
          %580 = vmatmul.bf16.gmra.mxu0 %v570
          %v581 = vpop.f32.mrf.mxu0
          %v582 = vadd.f32 %v554, %v581
          %v583 = vpop.f32.mrf.mxu0
          %584 = vdwg.mxu0
          %v585 = vpack.c.bf16 %v582, %v582
          %vm586 = vcmask 60416
          %587 = vst.msk [vmem:[#allocation2] sm:$0xf] %vm586, %v585
          %589 = vrot.lane.b32.xlu0 %v585, 96
          %v590 = vpop.permute.xlu0 %589
          %592 = vst.msk [vmem:[#allocation3] sm:$0xf] %vm586, %v590
          %593 = vrot.lane.b32.xlu0 %v585, 120
          %v594 = vpop.permute.xlu0 %593
          %s596 = scalar_lea.vmem [#allocation2], 4
          %597 = vst.msk [vmem:[%s596] sm:$0xf] %vm586, %v594
          %598 = vrot.lane.b32.xlu0 %v585, 88
          %v599 = vpop.permute.xlu0 %598
          %s601 = scalar_lea.vmem [#allocation3], 4
          %602 = vst.msk [vmem:[%s601] sm:$0xf] %vm586, %v599
          %603 = vrot.lane.b32.xlu0 %v585, 112
          %v604 = vpop.permute.xlu0 %603
          %s606 = scalar_lea.vmem [#allocation2], 8
          %607 = vst.msk [vmem:[%s606] sm:$0xf] %vm586, %v604
          %608 = vrot.lane.b32.xlu0 %v585, 80
          %v609 = vpop.permute.xlu0 %608
          %s611 = scalar_lea.vmem [#allocation3], 8
          %612 = vst.msk [vmem:[%s611] sm:$0xf] %vm586, %v609
          %613 = vrot.lane.b32.xlu0 %v585, 104
          %v614 = vpop.permute.xlu0 %613
          %s616 = scalar_lea.vmem [#allocation2], 12
          %617 = vst.msk [vmem:[%s616] sm:$0xf] %vm586, %v614
          %618 = vrot.lane.b32.xlu0 %v585, 72
          %v619 = vpop.permute.xlu0 %618
          %s621 = scalar_lea.vmem [#allocation3], 12
          %622 = vst.msk [vmem:[%s621] sm:$0xf] %vm586, %v619
        $region92: #{tpu_custom_call.1} parent=63 // pred_fallthru
          _
        %v623 = vld [vmem:[%s459] sm:$0xff]
        %v624 = vpack.c.bf16 %v623, %v623
        %v625 = vld [vmem:[#allocation10] sm:$0xf]
        %v626 = vld [vmem:[#allocation10 + $0x4] sm:$0xf]
        %v627 = vld [vmem:[#allocation10 + $0x8] sm:$0xf]
        %v628 = vld [vmem:[#allocation10 + $0xc] sm:$0xf]
        %v629 = vld [vmem:[%s4] sm:$0x1]
        %v631 = vperm.slane %v629, 0
        %v637 = vunpack.c.l.b16 %v625
        %v638 = vunpack.c.l.b16 %v626
        %v639 = vunpack.c.l.b16 %v627
        %v640 = vunpack.c.l.b16 %v628
        %v641 = vpack.c.b16 %v638, %v637
        %v642 = vpack.c.b16 %v640, %v639
        %vm645 = vcmask 261120
        %v647 = vsel %vm645, %v624, 0
        %649 = vmatpush.bf16.msra.mxu0 0
        %650 = vmatpush.bf16.msra.mxu0 0
        %651 = vmatpush.bf16.msra.mxu0 0
        %652 = vmatpush.bf16.msra.mxu0 0
        %653 = vmatpush.bf16.msra.mxu0 0
        %654 = vmatpush.bf16.msra.mxu0 0
        %655 = vmatpush.bf16.msra.mxu0 %v642
        %656 = vmatpush.bf16.msra.mxu0 %v641
        %657 = vmatmul.bf16.gmra.mxu0 %v647
        %v658 = vpop.f32.mrf.mxu0
        %v659 = vadd.f32 %v631, %v658
        %v660 = vpop.f32.mrf.mxu0
        %661 = vdwg.mxu0
        %663 = vrot.lane.b32.xlu0 %v659, 120
        %v664 = vpop.permute.xlu0 %663
        %666 = vrot.lane.b32.xlu0 %v659, 112
        %v667 = vpop.permute.xlu0 %666
        %669 = vrot.lane.b32.xlu0 %v659, 104
        %v670 = vpop.permute.xlu0 %669
        %v672 = vpack.c.bf16 %v659, %v659
        %v673 = vpack.c.bf16 %v664, %v664
        %v674 = vpack.c.bf16 %v667, %v667
        %v675 = vpack.c.bf16 %v670, %v670
        %v676 = vld [vmem:[#allocation2] sm:$0xf]
        %v677 = vld [vmem:[#allocation2 + $0x4] sm:$0xf]
        %v678 = vld [vmem:[#allocation2 + $0x8] sm:$0xf]
        %v679 = vld [vmem:[#allocation2 + $0xc] sm:$0xf]
        %v680 = vld [vmem:[#allocation3] sm:$0xf]
        %v681 = vld [vmem:[#allocation3 + $0x4] sm:$0xf]
        %v682 = vld [vmem:[#allocation3 + $0x8] sm:$0xf]
        %v683 = vld [vmem:[#allocation3 + $0xc] sm:$0xf]
        %vm684 = vcmask 64512
        %v686 = vsel %vm684, %v672, 0
        %v689 = vsel %vm684, %v676, 0
        %691 = vmatpush.bf16.xpose.msra.mxu0 0
        %692 = vmatpush.bf16.xpose.msra.mxu0 0
        %693 = vmatpush.bf16.xpose.msra.mxu0 0
        %694 = vmatpush.bf16.xpose.msra.mxu0 0
        %695 = vmatpush.bf16.xpose.msra.mxu0 0
        %696 = vmatpush.bf16.xpose.msra.mxu0 0
        %697 = vmatpush.bf16.xpose.msra.mxu0 0
        %698 = vmatpush.bf16.xpose.msra.mxu0 %v689
        %699 = vmatmul.bf16.gmra.mxu0 %v686
        %v700 = vpop.f32.mrf.mxu0
        %v701 = vadd.f32 0.0, %v700
        %v702 = vpop.f32.mrf.mxu0
        %703 = vdwg.mxu0
        %v705 = vsel %vm684, %v673, 0
        %v708 = vsel %vm684, %v677, 0
        %710 = vmatpush.bf16.xpose.msra.mxu0 0
        %711 = vmatpush.bf16.xpose.msra.mxu0 0
        %712 = vmatpush.bf16.xpose.msra.mxu0 0
        %713 = vmatpush.bf16.xpose.msra.mxu0 0
        %714 = vmatpush.bf16.xpose.msra.mxu0 0
        %715 = vmatpush.bf16.xpose.msra.mxu0 0
        %716 = vmatpush.bf16.xpose.msra.mxu0 0
        %717 = vmatpush.bf16.xpose.msra.mxu0 %v708
        %718 = vmatmul.bf16.gmra.mxu0 %v705
        %v719 = vpop.f32.mrf.mxu0
        %v720 = vadd.f32 0.0, %v719
        %v721 = vpop.f32.mrf.mxu0
        %722 = vdwg.mxu0
        %v724 = vsel %vm684, %v674, 0
        %v727 = vsel %vm684, %v678, 0
        %729 = vmatpush.bf16.xpose.msra.mxu0 0
        %730 = vmatpush.bf16.xpose.msra.mxu0 0
        %731 = vmatpush.bf16.xpose.msra.mxu0 0
        %732 = vmatpush.bf16.xpose.msra.mxu0 0
        %733 = vmatpush.bf16.xpose.msra.mxu0 0
        %734 = vmatpush.bf16.xpose.msra.mxu0 0
        %735 = vmatpush.bf16.xpose.msra.mxu0 0
        %736 = vmatpush.bf16.xpose.msra.mxu0 %v727
        %737 = vmatmul.bf16.gmra.mxu0 %v724
        %v738 = vpop.f32.mrf.mxu0
        %v739 = vadd.f32 0.0, %v738
        %v740 = vpop.f32.mrf.mxu0
        %741 = vdwg.mxu0
        %v743 = vsel %vm684, %v675, 0
        %v746 = vsel %vm684, %v679, 0
        %748 = vmatpush.bf16.xpose.msra.mxu0 0
        %749 = vmatpush.bf16.xpose.msra.mxu0 0
        %750 = vmatpush.bf16.xpose.msra.mxu0 0
        %751 = vmatpush.bf16.xpose.msra.mxu0 0
        %752 = vmatpush.bf16.xpose.msra.mxu0 0
        %753 = vmatpush.bf16.xpose.msra.mxu0 0
        %754 = vmatpush.bf16.xpose.msra.mxu0 0
        %755 = vmatpush.bf16.xpose.msra.mxu0 %v746
        %756 = vmatmul.bf16.gmra.mxu0 %v743
        %v757 = vpop.f32.mrf.mxu0
        %v758 = vadd.f32 0.0, %v757
        %v759 = vpop.f32.mrf.mxu0
        %760 = vdwg.mxu0
        %v761 = vmax.f32 %v701, -10000.0
        %v762 = vmax.f32 %v720, -10000.0
        %v763 = vmax.f32 %v739, -10000.0
        %v764 = vmax.f32 %v758, -10000.0
        %v765 = vmin.f32 %v761, 10000.0
        %v766 = vmin.f32 %v762, 10000.0
        %v767 = vmin.f32 %v763, 10000.0
        %v768 = vmin.f32 %v764, 10000.0
        %v769 = vld [vmem:[%s478] sm:$0x1]
        %v771 = vperm.slane %v769, 0
        %v773 = vadd.f32 %v765, %v771
        %v774 = vadd.f32 %v766, %v771
        %v775 = vadd.f32 %v767, %v771
        %v776 = vadd.f32 %v768, %v771
        %v777 = vsel %vm684, %v773, -inf
        %778 = vmax.xlane.f32.xlu0 %v777
        %v779 = vpop.xlane.xlu0 %778
        %v780 = vsel %vm684, %v774, -inf
        %781 = vmax.xlane.f32.xlu0 %v780
        %v782 = vpop.xlane.xlu0 %781
        %v783 = vsel %vm684, %v775, -inf
        %784 = vmax.xlane.f32.xlu0 %v783
        %v785 = vpop.xlane.xlu0 %784
        %v786 = vsel %vm684, %v776, -inf
        %787 = vmax.xlane.f32.xlu0 %v786
        %v788 = vpop.xlane.xlu0 %787
        %v789 = vsub.f32 %v773, %v779
        %v790 = vsub.f32 %v774, %v782
        %v791 = vsub.f32 %v775, %v785
        %v792 = vsub.f32 %v776, %v788
        %v793 = vmul.f32 %v789, 1.442695
        %v794 = vpow.pop %v793
        %v795 = vmul.f32 %v790, 1.442695
        %v796 = vpow.pop %v795
        %v797 = vmul.f32 %v791, 1.442695
        %v798 = vpow.pop %v797
        %v799 = vmul.f32 %v792, 1.442695
        %v800 = vpow.pop %v799
        %v801 = vsel %vm684, %v794, 0.0
        %802 = vadd.xlane.f32.xlu0 %v801
        %v803 = vpop.xlane.xlu0 %802
        %v804 = vsel %vm684, %v796, 0.0
        %805 = vadd.xlane.f32.xlu0 %v804
        %v806 = vpop.xlane.xlu0 %805
        %v807 = vsel %vm684, %v798, 0.0
        %808 = vadd.xlane.f32.xlu0 %v807
        %v809 = vpop.xlane.xlu0 %808
        %v810 = vsel %vm684, %v800, 0.0
        %811 = vadd.xlane.f32.xlu0 %v810
        %v812 = vpop.xlane.xlu0 %811
        %v813 = vpack.c.bf16 %v794, %v794
        %v814 = vpack.c.bf16 %v796, %v796
        %v815 = vpack.c.bf16 %v798, %v798
        %v816 = vpack.c.bf16 %v800, %v800
        %v818 = vsel %vm684, %v813, 0
        %vm820 = vcmask 1043456
        %v822 = vsel %vm820, %v680, 0
        %824 = vmatpush.bf16.msra.mxu0 0
        %825 = vmatpush.bf16.msra.mxu0 0
        %826 = vmatpush.bf16.msra.mxu0 0
        %827 = vmatpush.bf16.msra.mxu0 0
        %828 = vmatpush.bf16.msra.mxu0 0
        %829 = vmatpush.bf16.msra.mxu0 0
        %830 = vmatpush.bf16.msra.mxu0 0
        %831 = vmatpush.bf16.msra.mxu0 %v822
        %832 = vmatmul.bf16.gmra.mxu0 %v818
        %v833 = vpop.f32.mrf.mxu0
        %v834 = vadd.f32 0.0, %v833
        %v835 = vpop.f32.mrf.mxu0
        %836 = vdwg.mxu0
        %v838 = vsel %vm684, %v814, 0
        %v841 = vsel %vm820, %v681, 0
        %843 = vmatpush.bf16.msra.mxu0 0
        %844 = vmatpush.bf16.msra.mxu0 0
        %845 = vmatpush.bf16.msra.mxu0 0
        %846 = vmatpush.bf16.msra.mxu0 0
        %847 = vmatpush.bf16.msra.mxu0 0
        %848 = vmatpush.bf16.msra.mxu0 0
        %849 = vmatpush.bf16.msra.mxu0 0
        %850 = vmatpush.bf16.msra.mxu0 %v841
        %851 = vmatmul.bf16.gmra.mxu0 %v838
        %v852 = vpop.f32.mrf.mxu0
        %v853 = vadd.f32 0.0, %v852
        %v854 = vpop.f32.mrf.mxu0
        %855 = vdwg.mxu0
        %v857 = vsel %vm684, %v815, 0
        %v860 = vsel %vm820, %v682, 0
        %862 = vmatpush.bf16.msra.mxu0 0
        %863 = vmatpush.bf16.msra.mxu0 0
        %864 = vmatpush.bf16.msra.mxu0 0
        %865 = vmatpush.bf16.msra.mxu0 0
        %866 = vmatpush.bf16.msra.mxu0 0
        %867 = vmatpush.bf16.msra.mxu0 0
        %868 = vmatpush.bf16.msra.mxu0 0
        %869 = vmatpush.bf16.msra.mxu0 %v860
        %870 = vmatmul.bf16.gmra.mxu0 %v857
        %v871 = vpop.f32.mrf.mxu0
        %v872 = vadd.f32 0.0, %v871
        %v873 = vpop.f32.mrf.mxu0
        %874 = vdwg.mxu0
        %v876 = vsel %vm684, %v816, 0
        %v879 = vsel %vm820, %v683, 0
        %881 = vmatpush.bf16.msra.mxu0 0
        %882 = vmatpush.bf16.msra.mxu0 0
        %883 = vmatpush.bf16.msra.mxu0 0
        %884 = vmatpush.bf16.msra.mxu0 0
        %885 = vmatpush.bf16.msra.mxu0 0
        %886 = vmatpush.bf16.msra.mxu0 0
        %887 = vmatpush.bf16.msra.mxu0 0
        %888 = vmatpush.bf16.msra.mxu0 %v879
        %889 = vmatmul.bf16.gmra.mxu0 %v876
        %v890 = vpop.f32.mrf.mxu0
        %v891 = vadd.f32 0.0, %v890
        %v892 = vpop.f32.mrf.mxu0
        %893 = vdwg.mxu0
        %v894 = vrcp.pop %v803
        %v895 = vrcp.pop %v806
        %v896 = vrcp.pop %v809
        %v897 = vrcp.pop %v812
        %v898 = vmul.f32 %v834, %v894
        %v899 = vmul.f32 %v853, %v895
        %v900 = vmul.f32 %v872, %v896
        %v901 = vmul.f32 %v891, %v897
        %903 = vrot.lane.b32.xlu0 %v899, 8
        %v904 = vpop.permute.xlu0 %903
        %907 = vrot.lane.b32.xlu0 %v900, 16
        %v908 = vpop.permute.xlu0 %907
        %911 = vrot.lane.b32.xlu0 %v901, 24
        %v912 = vpop.permute.xlu0 %911
        %v914 = vsel %vm684, %v898, %v904
        %vm915 = vcmask 130048
        %v916 = vsel %vm915, %v914, %v908
        %vm917 = vcmask 195584
        %v918 = vsel %vm917, %v916, %v912
        %v919 = vpack.c.bf16 %v918, %v918
        %v920 = vld [vmem:[#allocation13] sm:$0xf]
        %v921 = vld [vmem:[#allocation13 + $0x4] sm:$0xf]
        %v922 = vld [vmem:[#allocation13 + $0x8] sm:$0xf]
        %v923 = vld [vmem:[#allocation13 + $0xc] sm:$0xf]
        %v924 = vld [vmem:[%s8] sm:$0x1]
        %v926 = vperm.slane %v924, 0
        %v932 = vunpack.c.l.b16 %v920
        %v933 = vunpack.c.l.b16 %v921
        %v934 = vunpack.c.l.b16 %v922
        %v935 = vunpack.c.l.b16 %v923
        %v936 = vpack.c.b16 %v933, %v932
        %v937 = vpack.c.b16 %v935, %v934
        %v941 = vsel %vm645, %v919, 0
        %943 = vmatpush.bf16.msra.mxu0 0
        %944 = vmatpush.bf16.msra.mxu0 0
        %945 = vmatpush.bf16.msra.mxu0 0
        %946 = vmatpush.bf16.msra.mxu0 0
        %947 = vmatpush.bf16.msra.mxu0 0
        %948 = vmatpush.bf16.msra.mxu0 0
        %949 = vmatpush.bf16.msra.mxu0 %v937
        %950 = vmatpush.bf16.msra.mxu0 %v936
        %951 = vmatmul.bf16.gmra.mxu0 %v941
        %v952 = vpop.f32.mrf.mxu0
        %v953 = vadd.f32 %v926, %v952
        %v954 = vpop.f32.mrf.mxu0
        %955 = vdwg.mxu0
        %v956 = vadd.f32 %v953, %v623
        %v957 = vsel %vm645, %v956, 0.0
        %958 = vadd.xlane.f32.xlu0 %v957
        %v959 = vpop.xlane.xlu0 %958
        %v960 = vrcp.pop 32.0
        %v961 = vmul.f32 32.0, %v960
        %v962 = vsub.f32 1.0, %v961
        %v963 = vmul.f32 %v960, %v962
        %v964 = vadd.f32 %v960, %v963
        %vm965 = vweird.f32 %v960
        %v966 = vsel %vm965, %v960, %v964
        %v967 = vmul.f32 %v959, %v966
        %v968 = vsub.f32 %v956, %v967
        %v969 = vmul.f32 %v968, %v968
        %v970 = vsel %vm645, %v969, 0.0
        %971 = vadd.xlane.f32.xlu0 %v970
        %v972 = vpop.xlane.xlu0 %971
        %v973 = vmul.f32 %v972, %v966
        %v974 = vld [vmem:[%s9] sm:$0x1]
        %v975 = vadd.f32 %v973, 1e-12
        %v976 = vrsqrt.pop %v975
        %v977 = vmul.f32 %v976, %v975
        %v978 = vmul.f32 %v977, %v976
        %v979 = vmul.f32 0.5, %v978
        %v980 = vsub.f32 1.5, %v979
        %v981 = vmul.f32 %v976, %v980
        %vm982 = vweird.f32 %v975
        %vm983 = vweird.f32 %v976
        %vm984 = vmor %vm982, %vm983
        %v985 = vsel %vm984, %v976, %v981
        %v986 = vmul.f32 %v968, %v985
        %v988 = vperm.slane %v974, 0
        %v990 = vmul.f32 %v988, %v986
        %v991 = vld [vmem:[%s10] sm:$0x1]
        %v993 = vperm.slane %v991, 0
        %v995 = vadd.f32 %v990, %v993
        %996 = vst.msk [vmem:[%s541] sm:$0xff] %vm645, %v995
        %s997 = sand.u32 %s303, 1
        %s998 = scalar_lea.sflag [#allocation6], %s997
        %s999 = sand.u32 %s303, 1
        %s1000 = smul.addr %s999, 8
        %s1001 = scalar_lea.vmem [#allocation15], %s1000
        // Predicated region
        $region93: #{tpu_custom_call.1} parent=63 // pred_check
          %p1002 = pneg %p313
        $region94: #{tpu_custom_call.1} parent=63 // pred_check_branch
          %1004 = sbr.rel (%p1002) target = $region96
        $region95: #{tpu_custom_call.1} parent=63 // pred_region
          %1006 = vsyncadd %s998, 0
          %s1007 = sadd.s32 %s38, %s37
          %s1008 = smul.addr %s1007, 8
          %s1009 = scalar_lea.hbm %s11, %s1008
          %s1011 = sshll.u32 %s1001, 4
          %s1012 = int_to_ptr.vmem [resolvable:$true] %s1011
          %s1013 = sshll.u32 %s1009, 4
          %s1014 = int_to_ptr.hbm [resolvable:$true] %s1013
          %1016 = dma.vmem_to_hbm [thread:$0]  %s1012, 128, %s1014, %s998
        $region96: #{tpu_custom_call.1} parent=63 // pred_fallthru
          _
      $region64: #{tpu_custom_call.1} parent=5 // pred_fallthru
        _
      %p1017 = scmp.le.s32.totalorder 2, %s28
      // Predicated region
      $region97: #{tpu_custom_call.1} parent=5 // pred_check
        %p1018 = pneg %p1017
      $region98: #{tpu_custom_call.1} parent=5 // pred_check_branch
        %1020 = sbr.rel (%p1018) target = $region100
      $region99: #{tpu_custom_call.1} parent=5 // pred_region
        %s1021 = ssub.s32 %s28, 2
        // Predicated region
        $region101: #{tpu_custom_call.1} parent=99 // pred_check
          %p1022 = pneg %p319
        $region102: #{tpu_custom_call.1} parent=99 // pred_check_branch
          %1024 = sbr.rel (%p1022) target = $region104
        $region103: #{tpu_custom_call.1} parent=99 // pred_region
          %s1025 = sand.u32 %s304, 1
          %s1026 = scalar_lea.sflag [#allocation6], %s1025
          %s1027 = sand.u32 %s304, 1
          %s1028 = smul.addr %s1027, 8
          %s1029 = scalar_lea.vmem [#allocation15], %s1028
          %1031 = dma.done %s1026, 128
        $region104: #{tpu_custom_call.1} parent=99 // pred_fallthru
          _
      $region100: #{tpu_custom_call.1} parent=5 // pred_fallthru
        _
    $region6: #{tpu_custom_call.1} parent=1 // loop_footer
      %s32 = sadd.s32 1, %s28
    $region7: #{tpu_custom_call.1} parent=1 // loop_footer_branch
      %27 = sbr.rel target = $region3
    $region8: #{tpu_custom_call.1} parent=1 // loop_exit
      _
    %1032 = vsyncpa [#allocation5], 1
    %s1033 = scalar_lea.sflag [#allocation5], 1
    %1034 = vsyncpa %s1033, 1
    %1035 = vsyncpa [#allocation8], 1
    %s1036 = scalar_lea.sflag [#allocation8], 1
    %1037 = vsyncpa %s1036, 1
    %1038 = vsyncpa [#allocation11], 1
    %1039 = vsyncpa [#allocation14], 1
    %1040 = vsyncpa [#allocation6], 1
    %s1041 = scalar_lea.sflag [#allocation6], 1
    %1042 = vsyncpa %s1041, 1

// kernel: tpu_custom_call.1
$region0: #{tpu_custom_call.1}
  #allocation0 [shape = 'u32[]', space=smem, size = 0x4, offset = 0x4, fixed_abs, tag = 'smem constant byte address 0x4 - core index']
  #allocation1 [shape = 'u32[72,128]{1,0:T(1,128)}', space=vmem, size = 0x9000, scoped, tag = 'internal scratch']
  #allocation2 [shape = 'bf16[4,8,8]{2,1,0:T(8,128)(2,1)}', space=vmem, size = 0x2000, scoped, tag = 'scratch operand']
  #allocation3 [shape = 'bf16[4,8,8]{2,1,0:T(8,128)(2,1)}', space=vmem, size = 0x2000, scoped, tag = 'scratch operand']
  %s0 = inlined_call_operand.hbm [shape: f32[2,8,32], index: 0, kind: input, shape index: {}]
  %s1 = inlined_call_operand.hbm [shape: bf16[2,8,32], index: 1, kind: input, shape index: {}]
  %s2 = inlined_call_operand.hbm [shape: f32[2,1,1,8], index: 2, kind: input, shape index: {}]
  %s3 = inlined_call_operand.hbm [shape: bf16[32,32], index: 3, kind: input, shape index: {}]
  %s4 = inlined_call_operand.vmem [shape: f32[1,32], index: 4, kind: input, shape index: {}]
  %s5 = inlined_call_operand.hbm [shape: bf16[32,64], index: 5, kind: input, shape index: {}]
  %s6 = inlined_call_operand.vmem [shape: f32[1,64], index: 6, kind: input, shape index: {}]
  %s7 = inlined_call_operand.hbm [shape: bf16[32,32], index: 7, kind: input, shape index: {}]
  %s8 = inlined_call_operand.vmem [shape: f32[1,32], index: 8, kind: input, shape index: {}]
  %s9 = inlined_call_operand.vmem [shape: f32[1,32], index: 9, kind: input, shape index: {}]
  %s10 = inlined_call_operand.vmem [shape: f32[1,32], index: 10, kind: input, shape index: {}]
  %s11 = inlined_call_operand.hbm [shape: f32[2,8,32], index: 11, kind: output, shape index: {}]
  %s12 = sld [smem:[#allocation0]]
  $region105: #{tpu_custom_call.1} parent=0
    _
  %s14 = ssub.s32 1, %s12
  %s15 = scalar_select 0, %s14, %s12
  $region1: #{tpu_custom_call.1} parent=0
    #allocation4 [shape = 'u8[8192]{0}', space=vmem, size = 0x2000, scoped, tag = 'input window, operand 0']
    #allocation5 [shape = 's32[2]{0}', space=sflag, size = 0x8, scoped, tag = 'scoped memory for tpu_custom_call.1']
    #allocation6 [shape = 's32[2]{0}', space=sflag, size = 0x8, scoped, tag = 'scoped memory for tpu_custom_call.1']
    #allocation7 [shape = 'u8[4096]{0}', space=vmem, size = 0x1000, scoped, tag = 'input window, operand 1']
    #allocation8 [shape = 's32[2]{0}', space=sflag, size = 0x8, scoped, tag = 'scoped memory for tpu_custom_call.1']
    #allocation9 [shape = 'u8[1024]{0}', space=vmem, size = 0x400, scoped, tag = 'input window, operand 2']
    #allocation10 [shape = 'u8[8192]{0}', space=vmem, size = 0x2000, scoped, tag = 'input window, operand 3, single buffered']
    #allocation11 [shape = 's32[1]{0}', space=sflag, size = 0x4, scoped, tag = 'scoped memory for tpu_custom_call.1']
    #allocation12 [shape = 'u8[8192]{0}', space=vmem, size = 0x2000, scoped, tag = 'input window, operand 5, single buffered']
    #allocation13 [shape = 'u8[8192]{0}', space=vmem, size = 0x2000, scoped, tag = 'input window, operand 7, single buffered']
    #allocation14 [shape = 's32[1]{0}', space=sflag, size = 0x4, scoped, tag = 'scoped memory for tpu_custom_call.1']
    #allocation15 [shape = 'u8[8192]{0}', space=vmem, size = 0x2000, scoped, tag = 'output window, operand 0']
    %16 = vsyncpa [#allocation5], 0
    %s17 = scalar_lea.sflag [#allocation5], 1
    %18 = vsyncpa %s17, 0
    %19 = vsyncpa [#allocation8], 0
    %s20 = scalar_lea.sflag [#allocation8], 1
    %21 = vsyncpa %s20, 0
    %22 = vsyncpa [#allocation11], 0
    %23 = vsyncpa [#allocation14], 0
    %24 = vsyncpa [#allocation6], 0
    %s25 = scalar_lea.sflag [#allocation6], 1
    %26 = vsyncpa %s25, 0
    loop: start=0, step=1, limit=4
    $region2: #{tpu_custom_call.1} parent=1 // loop_pre_header
      _
    $region3: #{tpu_custom_call.1} parent=1 // loop_header
      %s28 = sphi 0, %s32
      %p29 = scmp.ge.s32.totalorder %s28, 4
      %s35 = sphi 0, %s47
      %s36 = sphi 0, %s43
      %s37 = sphi 0, %s35
      %s38 = sphi 0, %s36
      %s39 = sphi 0, %s37
      %s40 = sphi 0, %s38
      %s52 = sphi 0, %s54
      %s55 = sphi 0, %s52
      %s56 = sphi 0, %s55
      %s72 = sphi 0, %s56
      %s78 = sphi 0, %s80
      %s81 = sphi 0, %s78
      %s82 = sphi 0, %s81
      %s98 = sphi 0, %s82
      %s104 = sphi 0, %s106
      %s107 = sphi 0, %s104
      %s108 = sphi 0, %s107
      %s124 = sphi 0, %s108
      %s128 = sphi 0, %s128
      %s130 = sphi 0, %s128
      %s131 = sphi 0, %s130
      %s145 = sphi 0, %s131
      %s149 = sphi 0, %s149
      %s151 = sphi 0, %s149
      %s152 = sphi 0, %s151
      %s166 = sphi 0, %s152
      %s170 = sphi 0, %s170
      %s172 = sphi 0, %s170
      %s173 = sphi 0, %s172
      %s187 = sphi 0, %s173
      %s191 = sphi 0, %s191
      %s193 = sphi 0, %s191
      %s194 = sphi 0, %s193
      %s208 = sphi 0, %s194
      %s212 = sphi 0, %s212
      %s214 = sphi 0, %s212
      %s215 = sphi 0, %s214
      %s229 = sphi 0, %s215
      %s233 = sphi 0, %s233
      %s235 = sphi 0, %s233
      %s236 = sphi 0, %s235
      %s250 = sphi 0, %s236
      %s254 = sphi 0, %s254
      %s256 = sphi 0, %s254
      %s257 = sphi 0, %s256
      %s271 = sphi 0, %s257
      %s275 = sphi 0, %s275
      %s277 = sphi 0, %s275
      %s278 = sphi 0, %s277
      %s292 = sphi 0, %s278
      %s300 = sphi 0, %s302
      %s303 = sphi 0, %s300
      %s304 = sphi 0, %s303
      %s320 = sphi 0, %s304
    $region4: #{tpu_custom_call.1} parent=1 // loop_header_branch
      %31 = sbr.rel (%p29) target = $region8
    $region5: #{tpu_custom_call.1} parent=1 // loop_body
      %s33 = ssub.s32 %s28, 1
      %s34 = ssub.s32 %s28, 2
      %s41 = sadd.s32 1, %s36
      %p42 = scmp.ge.s32.totalorder %s41, 1
      %s43 = scalar_select %p42, 0, %s41
      %s44 = sadd.s32 1, %s35
      %s45 = scalar_select %p42, %s44, %s35
      %p46 = scmp.ge.s32.totalorder %s45, 2
      %s47 = scalar_select %p46, 0, %s45
      %s48 = ssub.s32 %s35, %s47
      %s49 = ssub.s32 %s36, %s43
      %s50 = sor.u32 %s48, %s49
      %p51 = scmp.eq.s32.totalorder %s50, 0
      %s53 = sadd.s32 %s52, 1
      %s54 = scalar_select %p51, %s52, %s53
      %p57 = pneg %p51
      %p58 = scmp.eq.s32.totalorder %s28, 1
      %p59 = por %p57, %p58
      %p60 = scmp.ne.s32.totalorder %s52, %s55
      %p61 = scmp.eq.s32.totalorder %s28, 0
      %p62 = por %p60, %p61
      %p63 = scmp.ne.s32.totalorder %s52, %s55
      %p64 = scmp.eq.s32.totalorder %s33, 1
      %p65 = por %p63, %p64
      %p66 = scmp.ne.s32.totalorder %s55, %s56
      %p67 = scmp.eq.s32.totalorder %s33, 0
      %p68 = por %p66, %p67
      %p69 = scmp.ne.s32.totalorder %s55, %s56
      %p70 = scmp.eq.s32.totalorder %s34, 1
      %p71 = por %p69, %p70
      %p73 = scmp.ne.s32.totalorder %s56, %s72
      %p74 = scmp.eq.s32.totalorder %s34, 0
      %p75 = por %p73, %p74
      %s76 = ssub.s32 %s35, %s47
      %p77 = scmp.eq.s32.totalorder %s76, 0
      %s79 = sadd.s32 %s78, 1
      %s80 = scalar_select %p77, %s78, %s79
      %p83 = pneg %p77
      %p84 = scmp.eq.s32.totalorder %s28, 1
      %p85 = por %p83, %p84
      %p86 = scmp.ne.s32.totalorder %s78, %s81
      %p87 = scmp.eq.s32.totalorder %s28, 0
      %p88 = por %p86, %p87
      %p89 = scmp.ne.s32.totalorder %s78, %s81
      %p90 = scmp.eq.s32.totalorder %s33, 1
      %p91 = por %p89, %p90
      %p92 = scmp.ne.s32.totalorder %s81, %s82
      %p93 = scmp.eq.s32.totalorder %s33, 0
      %p94 = por %p92, %p93
      %p95 = scmp.ne.s32.totalorder %s81, %s82
      %p96 = scmp.eq.s32.totalorder %s34, 1
      %p97 = por %p95, %p96
      %p99 = scmp.ne.s32.totalorder %s82, %s98
      %p100 = scmp.eq.s32.totalorder %s34, 0
      %p101 = por %p99, %p100
      %s102 = ssub.s32 %s35, %s47
      %p103 = scmp.eq.s32.totalorder %s102, 0
      %s105 = sadd.s32 %s104, 1
      %s106 = scalar_select %p103, %s104, %s105
      %p109 = pneg %p103
      %p110 = scmp.eq.s32.totalorder %s28, 1
      %p111 = por %p109, %p110
      %p112 = scmp.ne.s32.totalorder %s104, %s107
      %p113 = scmp.eq.s32.totalorder %s28, 0
      %p114 = por %p112, %p113
      %p115 = scmp.ne.s32.totalorder %s104, %s107
      %p116 = scmp.eq.s32.totalorder %s33, 1
      %p117 = por %p115, %p116
      %p118 = scmp.ne.s32.totalorder %s107, %s108
      %p119 = scmp.eq.s32.totalorder %s33, 0
      %p120 = por %p118, %p119
      %p121 = scmp.ne.s32.totalorder %s107, %s108
      %p122 = scmp.eq.s32.totalorder %s34, 1
      %p123 = por %p121, %p122
      %p125 = scmp.ne.s32.totalorder %s108, %s124
      %p126 = scmp.eq.s32.totalorder %s34, 0
      %p127 = por %p125, %p126
      %s129 = sadd.s32 %s128, 1
      %p132 = scmp.eq.s32.totalorder %s28, 1
      %p133 = scmp.ne.s32.totalorder %s128, %s130
      %p134 = scmp.eq.s32.totalorder %s28, 0
      %p135 = por %p133, %p134
      %p136 = scmp.ne.s32.totalorder %s128, %s130
      %p137 = scmp.eq.s32.totalorder %s33, 1
      %p138 = por %p136, %p137
      %p139 = scmp.ne.s32.totalorder %s130, %s131
      %p140 = scmp.eq.s32.totalorder %s33, 0
      %p141 = por %p139, %p140
      %p142 = scmp.ne.s32.totalorder %s130, %s131
      %p143 = scmp.eq.s32.totalorder %s34, 1
      %p144 = por %p142, %p143
      %p146 = scmp.ne.s32.totalorder %s131, %s145
      %p147 = scmp.eq.s32.totalorder %s34, 0
      %p148 = por %p146, %p147
      %s150 = sadd.s32 %s149, 1
      %p153 = scmp.eq.s32.totalorder %s28, 1
      %p154 = scmp.ne.s32.totalorder %s149, %s151
      %p155 = scmp.eq.s32.totalorder %s28, 0
      %p156 = por %p154, %p155
      %p157 = scmp.ne.s32.totalorder %s149, %s151
      %p158 = scmp.eq.s32.totalorder %s33, 1
      %p159 = por %p157, %p158
      %p160 = scmp.ne.s32.totalorder %s151, %s152
      %p161 = scmp.eq.s32.totalorder %s33, 0
      %p162 = por %p160, %p161
      %p163 = scmp.ne.s32.totalorder %s151, %s152
      %p164 = scmp.eq.s32.totalorder %s34, 1
      %p165 = por %p163, %p164
      %p167 = scmp.ne.s32.totalorder %s152, %s166
      %p168 = scmp.eq.s32.totalorder %s34, 0
      %p169 = por %p167, %p168
      %s171 = sadd.s32 %s170, 1
      %p174 = scmp.eq.s32.totalorder %s28, 1
      %p175 = scmp.ne.s32.totalorder %s170, %s172
      %p176 = scmp.eq.s32.totalorder %s28, 0
      %p177 = por %p175, %p176
      %p178 = scmp.ne.s32.totalorder %s170, %s172
      %p179 = scmp.eq.s32.totalorder %s33, 1
      %p180 = por %p178, %p179
      %p181 = scmp.ne.s32.totalorder %s172, %s173
      %p182 = scmp.eq.s32.totalorder %s33, 0
      %p183 = por %p181, %p182
      %p184 = scmp.ne.s32.totalorder %s172, %s173
      %p185 = scmp.eq.s32.totalorder %s34, 1
      %p186 = por %p184, %p185
      %p188 = scmp.ne.s32.totalorder %s173, %s187
      %p189 = scmp.eq.s32.totalorder %s34, 0
      %p190 = por %p188, %p189
      %s192 = sadd.s32 %s191, 1
      %p195 = scmp.eq.s32.totalorder %s28, 1
      %p196 = scmp.ne.s32.totalorder %s191, %s193
      %p197 = scmp.eq.s32.totalorder %s28, 0
      %p198 = por %p196, %p197
      %p199 = scmp.ne.s32.totalorder %s191, %s193
      %p200 = scmp.eq.s32.totalorder %s33, 1
      %p201 = por %p199, %p200
      %p202 = scmp.ne.s32.totalorder %s193, %s194
      %p203 = scmp.eq.s32.totalorder %s33, 0
      %p204 = por %p202, %p203
      %p205 = scmp.ne.s32.totalorder %s193, %s194
      %p206 = scmp.eq.s32.totalorder %s34, 1
      %p207 = por %p205, %p206
      %p209 = scmp.ne.s32.totalorder %s194, %s208
      %p210 = scmp.eq.s32.totalorder %s34, 0
      %p211 = por %p209, %p210
      %s213 = sadd.s32 %s212, 1
      %p216 = scmp.eq.s32.totalorder %s28, 1
      %p217 = scmp.ne.s32.totalorder %s212, %s214
      %p218 = scmp.eq.s32.totalorder %s28, 0
      %p219 = por %p217, %p218
      %p220 = scmp.ne.s32.totalorder %s212, %s214
      %p221 = scmp.eq.s32.totalorder %s33, 1
      %p222 = por %p220, %p221
      %p223 = scmp.ne.s32.totalorder %s214, %s215
      %p224 = scmp.eq.s32.totalorder %s33, 0
      %p225 = por %p223, %p224
      %p226 = scmp.ne.s32.totalorder %s214, %s215
      %p227 = scmp.eq.s32.totalorder %s34, 1
      %p228 = por %p226, %p227
      %p230 = scmp.ne.s32.totalorder %s215, %s229
      %p231 = scmp.eq.s32.totalorder %s34, 0
      %p232 = por %p230, %p231
      %s234 = sadd.s32 %s233, 1
      %p237 = scmp.eq.s32.totalorder %s28, 1
      %p238 = scmp.ne.s32.totalorder %s233, %s235
      %p239 = scmp.eq.s32.totalorder %s28, 0
      %p240 = por %p238, %p239
      %p241 = scmp.ne.s32.totalorder %s233, %s235
      %p242 = scmp.eq.s32.totalorder %s33, 1
      %p243 = por %p241, %p242
      %p244 = scmp.ne.s32.totalorder %s235, %s236
      %p245 = scmp.eq.s32.totalorder %s33, 0
      %p246 = por %p244, %p245
      %p247 = scmp.ne.s32.totalorder %s235, %s236
      %p248 = scmp.eq.s32.totalorder %s34, 1
      %p249 = por %p247, %p248
      %p251 = scmp.ne.s32.totalorder %s236, %s250
      %p252 = scmp.eq.s32.totalorder %s34, 0
      %p253 = por %p251, %p252
      %s255 = sadd.s32 %s254, 1
      %p258 = scmp.eq.s32.totalorder %s28, 1
      %p259 = scmp.ne.s32.totalorder %s254, %s256
      %p260 = scmp.eq.s32.totalorder %s28, 0
      %p261 = por %p259, %p260
      %p262 = scmp.ne.s32.totalorder %s254, %s256
      %p263 = scmp.eq.s32.totalorder %s33, 1
      %p264 = por %p262, %p263
      %p265 = scmp.ne.s32.totalorder %s256, %s257
      %p266 = scmp.eq.s32.totalorder %s33, 0
      %p267 = por %p265, %p266
      %p268 = scmp.ne.s32.totalorder %s256, %s257
      %p269 = scmp.eq.s32.totalorder %s34, 1
      %p270 = por %p268, %p269
      %p272 = scmp.ne.s32.totalorder %s257, %s271
      %p273 = scmp.eq.s32.totalorder %s34, 0
      %p274 = por %p272, %p273
      %s276 = sadd.s32 %s275, 1
      %p279 = scmp.eq.s32.totalorder %s28, 1
      %p280 = scmp.ne.s32.totalorder %s275, %s277
      %p281 = scmp.eq.s32.totalorder %s28, 0
      %p282 = por %p280, %p281
      %p283 = scmp.ne.s32.totalorder %s275, %s277
      %p284 = scmp.eq.s32.totalorder %s33, 1
      %p285 = por %p283, %p284
      %p286 = scmp.ne.s32.totalorder %s277, %s278
      %p287 = scmp.eq.s32.totalorder %s33, 0
      %p288 = por %p286, %p287
      %p289 = scmp.ne.s32.totalorder %s277, %s278
      %p290 = scmp.eq.s32.totalorder %s34, 1
      %p291 = por %p289, %p290
      %p293 = scmp.ne.s32.totalorder %s278, %s292
      %p294 = scmp.eq.s32.totalorder %s34, 0
      %p295 = por %p293, %p294
      %s296 = ssub.s32 %s35, %s47
      %s297 = ssub.s32 %s36, %s43
      %s298 = sor.u32 %s296, %s297
      %p299 = scmp.eq.s32.totalorder %s298, 0
      %s301 = sadd.s32 %s300, 1
      %s302 = scalar_select %p299, %s300, %s301
      %p305 = pneg %p299
      %p306 = scmp.eq.s32.totalorder %s28, 1
      %p307 = por %p305, %p306
      %p308 = scmp.ne.s32.totalorder %s300, %s303
      %p309 = scmp.eq.s32.totalorder %s28, 0
      %p310 = por %p308, %p309
      %p311 = scmp.ne.s32.totalorder %s300, %s303
      %p312 = scmp.eq.s32.totalorder %s33, 1
      %p313 = por %p311, %p312
      %p314 = scmp.ne.s32.totalorder %s303, %s304
      %p315 = scmp.eq.s32.totalorder %s33, 0
      %p316 = por %p314, %p315
      %p317 = scmp.ne.s32.totalorder %s303, %s304
      %p318 = scmp.eq.s32.totalorder %s34, 1
      %p319 = por %p317, %p318
      %p321 = scmp.ne.s32.totalorder %s304, %s320
      %p322 = scmp.eq.s32.totalorder %s34, 0
      %p323 = por %p321, %p322
      %p324 = scmp.le.s32.totalorder 1, %s28
      %p325 = scmp.lt.s32.totalorder %s28, 3
      %p326 = pnand %p324, %p325
      %p327 = pneg %p326
      // Predicated region
      $region9: #{tpu_custom_call.1} parent=5 // pred_check
        _
      $region10: #{tpu_custom_call.1} parent=5 // pred_check_branch
        %329 = sbr.rel (%p326) target = $region12
      $region11: #{tpu_custom_call.1} parent=5 // pred_region
        %s330 = ssub.s32 %s28, 1
        // Predicated region
        $region13: #{tpu_custom_call.1} parent=11 // pred_check
          %p331 = pneg %p141
        $region14: #{tpu_custom_call.1} parent=11 // pred_check_branch
          %333 = sbr.rel (%p331) target = $region16
        $region15: #{tpu_custom_call.1} parent=11 // pred_region
          %335 = vsyncadd [#allocation11], 0
          %s336 = sshll.u32 %s3, 4
          %s337 = int_to_ptr.hbm [resolvable:$true] %s336
          %s338 = sshll.u32 [#allocation10], 4
          %s339 = int_to_ptr.vmem [resolvable:$true] %s338
          %344 = dma.hbm_to_vmem [thread:$0]  %s337, 256, %s339, [#allocation11], 64, 64, 4
        $region16: #{tpu_custom_call.1} parent=11 // pred_fallthru
          _
        // Predicated region
        $region17: #{tpu_custom_call.1} parent=11 // pred_check
          %p345 = pneg %p162
        $region18: #{tpu_custom_call.1} parent=11 // pred_check_branch
          %347 = sbr.rel (%p345) target = $region20
        $region19: #{tpu_custom_call.1} parent=11 // pred_region
          _
        $region20: #{tpu_custom_call.1} parent=11 // pred_fallthru
          _
        // Predicated region
        $region21: #{tpu_custom_call.1} parent=11 // pred_check
          %p348 = pneg %p183
        $region22: #{tpu_custom_call.1} parent=11 // pred_check_branch
          %350 = sbr.rel (%p348) target = $region24
        $region23: #{tpu_custom_call.1} parent=11 // pred_region
          %352 = vsyncadd [#allocation11], 0
          %s353 = sshll.u32 %s5, 4
          %s354 = int_to_ptr.hbm [resolvable:$true] %s353
          %s355 = sshll.u32 [#allocation12], 4
          %s356 = int_to_ptr.vmem [resolvable:$true] %s355
          %361 = dma.hbm_to_vmem [thread:$0]  %s354, 256, %s356, [#allocation11], 64, 64, 4
        $region24: #{tpu_custom_call.1} parent=11 // pred_fallthru
          _
        // Predicated region
        $region25: #{tpu_custom_call.1} parent=11 // pred_check
          %p362 = pneg %p204
        $region26: #{tpu_custom_call.1} parent=11 // pred_check_branch
          %364 = sbr.rel (%p362) target = $region28
        $region27: #{tpu_custom_call.1} parent=11 // pred_region
          _
        $region28: #{tpu_custom_call.1} parent=11 // pred_fallthru
          _
        // Predicated region
        $region29: #{tpu_custom_call.1} parent=11 // pred_check
          %p365 = pneg %p225
        $region30: #{tpu_custom_call.1} parent=11 // pred_check_branch
          %367 = sbr.rel (%p365) target = $region32
        $region31: #{tpu_custom_call.1} parent=11 // pred_region
          %369 = vsyncadd [#allocation14], 0
          %s370 = sshll.u32 %s7, 4
          %s371 = int_to_ptr.hbm [resolvable:$true] %s370
          %s372 = sshll.u32 [#allocation13], 4
          %s373 = int_to_ptr.vmem [resolvable:$true] %s372
          %378 = dma.hbm_to_vmem [thread:$0]  %s371, 256, %s373, [#allocation14], 64, 64, 4
        $region32: #{tpu_custom_call.1} parent=11 // pred_fallthru
          _
        // Predicated region
        $region33: #{tpu_custom_call.1} parent=11 // pred_check
          %p379 = pneg %p246
        $region34: #{tpu_custom_call.1} parent=11 // pred_check_branch
          %381 = sbr.rel (%p379) target = $region36
        $region35: #{tpu_custom_call.1} parent=11 // pred_region
          _
        $region36: #{tpu_custom_call.1} parent=11 // pred_fallthru
          _
        // Predicated region
        $region37: #{tpu_custom_call.1} parent=11 // pred_check
          %p382 = pneg %p267
        $region38: #{tpu_custom_call.1} parent=11 // pred_check_branch
          %384 = sbr.rel (%p382) target = $region40
        $region39: #{tpu_custom_call.1} parent=11 // pred_region
          _
        $region40: #{tpu_custom_call.1} parent=11 // pred_fallthru
          _
        // Predicated region
        $region41: #{tpu_custom_call.1} parent=11 // pred_check
          %p385 = pneg %p288
        $region42: #{tpu_custom_call.1} parent=11 // pred_check_branch
          %387 = sbr.rel (%p385) target = $region44
        $region43: #{tpu_custom_call.1} parent=11 // pred_region
          _
        $region44: #{tpu_custom_call.1} parent=11 // pred_fallthru
          _
      $region12: #{tpu_custom_call.1} parent=5 // pred_fallthru
        _
      %p388 = scmp.lt.s32.totalorder %s28, 2
      // Predicated region
      $region45: #{tpu_custom_call.1} parent=5 // pred_check
        %p389 = pneg %p388
      $region46: #{tpu_custom_call.1} parent=5 // pred_check_branch
        %391 = sbr.rel (%p389) target = $region48
      $region47: #{tpu_custom_call.1} parent=5 // pred_region
        // Predicated region
        $region49: #{tpu_custom_call.1} parent=47 // pred_check
          %p392 = pneg %p62
        $region50: #{tpu_custom_call.1} parent=47 // pred_check_branch
          %394 = sbr.rel (%p392) target = $region52
        $region51: #{tpu_custom_call.1} parent=47 // pred_region
          %s395 = sand.u32 %s52, 1
          %s396 = scalar_lea.sflag [#allocation5], %s395
          %s397 = sand.u32 %s52, 1
          %s398 = smul.addr %s397, 8
          %s399 = scalar_lea.vmem [#allocation4], %s398
          %401 = vsyncadd %s396, 0
          %s402 = sadd.s32 %s36, %s35
          %s403 = smul.addr %s402, 8
          %s404 = scalar_lea.hbm %s0, %s403
          %s406 = sshll.u32 %s404, 4
          %s407 = int_to_ptr.hbm [resolvable:$true] %s406
          %s408 = sshll.u32 %s399, 4
          %s409 = int_to_ptr.vmem [resolvable:$true] %s408
          %411 = dma.hbm_to_vmem [thread:$0]  %s407, 128, %s409, %s396
        $region52: #{tpu_custom_call.1} parent=47 // pred_fallthru
          _
        // Predicated region
        $region53: #{tpu_custom_call.1} parent=47 // pred_check
          %p412 = pneg %p88
        $region54: #{tpu_custom_call.1} parent=47 // pred_check_branch
          %414 = sbr.rel (%p412) target = $region56
        $region55: #{tpu_custom_call.1} parent=47 // pred_region
          %s415 = sand.u32 %s28, 1
          %s416 = scalar_lea.sflag [#allocation8], %s415
          %s417 = sand.u32 %s78, 1
          %s418 = smul.addr %s417, 4
          %s419 = scalar_lea.vmem [#allocation7], %s418
          %421 = vsyncadd %s416, 0
          %s422 = smul.addr %s35, 4
          %s423 = scalar_lea.hbm %s1, %s422
          %s425 = sshll.u32 %s423, 4
          %s426 = int_to_ptr.hbm [resolvable:$true] %s425
          %s427 = sshll.u32 %s419, 4
          %s428 = int_to_ptr.vmem [resolvable:$true] %s427
          %430 = dma.hbm_to_vmem [thread:$0]  %s426, 64, %s428, %s416
        $region56: #{tpu_custom_call.1} parent=47 // pred_fallthru
          _
        // Predicated region
        $region57: #{tpu_custom_call.1} parent=47 // pred_check
          %p431 = pneg %p114
        $region58: #{tpu_custom_call.1} parent=47 // pred_check_branch
          %433 = sbr.rel (%p431) target = $region60
        $region59: #{tpu_custom_call.1} parent=47 // pred_region
          %s434 = sand.u32 %s28, 1
          %s435 = scalar_lea.sflag [#allocation8], %s434
          %s436 = sand.u32 %s104, 1
          %s437 = scalar_lea.vmem [#allocation9], %s436
          %439 = vsyncadd %s435, 0
          %s440 = scalar_lea.hbm %s2, %s35
          %s442 = sshll.u32 %s440, 4
          %s443 = int_to_ptr.hbm [resolvable:$true] %s442
          %s444 = sshll.u32 %s437, 4
          %s445 = int_to_ptr.vmem [resolvable:$true] %s444
          %447 = dma.hbm_to_vmem [thread:$0]  %s443, 16, %s445, %s435
        $region60: #{tpu_custom_call.1} parent=47 // pred_fallthru
          _
      $region48: #{tpu_custom_call.1} parent=5 // pred_fallthru
        _
      %p448 = scmp.le.s32.totalorder 1, %s28
      %p449 = scmp.lt.s32.totalorder %s28, 3
      %p450 = pnand %p448, %p449
      %p451 = pneg %p450
      // Predicated region
      $region61: #{tpu_custom_call.1} parent=5 // pred_check
        _
      $region62: #{tpu_custom_call.1} parent=5 // pred_check_branch
        %453 = sbr.rel (%p450) target = $region64
      $region63: #{tpu_custom_call.1} parent=5 // pred_region
        %s454 = ssub.s32 %s28, 1
        %s455 = sand.u32 %s55, 1
        %s456 = scalar_lea.sflag [#allocation5], %s455
        %s457 = sand.u32 %s55, 1
        %s458 = smul.addr %s457, 8
        %s459 = scalar_lea.vmem [#allocation4], %s458
        // Predicated region
        $region65: #{tpu_custom_call.1} parent=63 // pred_check
          %p460 = pneg %p68
        $region66: #{tpu_custom_call.1} parent=63 // pred_check_branch
          %462 = sbr.rel (%p460) target = $region68
        $region67: #{tpu_custom_call.1} parent=63 // pred_region
          %464 = dma.done %s456, 128
        $region68: #{tpu_custom_call.1} parent=63 // pred_fallthru
          _
        %s465 = sand.u32 %s33, 1
        %s466 = scalar_lea.sflag [#allocation8], %s465
        %s467 = sand.u32 %s81, 1
        %s468 = smul.addr %s467, 4
        %s469 = scalar_lea.vmem [#allocation7], %s468
        // Predicated region
        $region69: #{tpu_custom_call.1} parent=63 // pred_check
          %p470 = pneg %p94
        $region70: #{tpu_custom_call.1} parent=63 // pred_check_branch
          %472 = sbr.rel (%p470) target = $region72
        $region71: #{tpu_custom_call.1} parent=63 // pred_region
          %474 = dma.done %s466, 64
        $region72: #{tpu_custom_call.1} parent=63 // pred_fallthru
          _
        %s475 = sand.u32 %s33, 1
        %s476 = scalar_lea.sflag [#allocation8], %s475
        %s477 = sand.u32 %s107, 1
        %s478 = scalar_lea.vmem [#allocation9], %s477
        // Predicated region
        $region73: #{tpu_custom_call.1} parent=63 // pred_check
          %p479 = pneg %p120
        $region74: #{tpu_custom_call.1} parent=63 // pred_check_branch
          %481 = sbr.rel (%p479) target = $region76
        $region75: #{tpu_custom_call.1} parent=63 // pred_region
          %483 = dma.done %s476, 16
        $region76: #{tpu_custom_call.1} parent=63 // pred_fallthru
          _
        // Predicated region
        $region77: #{tpu_custom_call.1} parent=63 // pred_check
          %p484 = pneg %p141
        $region78: #{tpu_custom_call.1} parent=63 // pred_check_branch
          %486 = sbr.rel (%p484) target = $region80
        $region79: #{tpu_custom_call.1} parent=63 // pred_region
          %488 = dma.done [#allocation11], 256
        $region80: #{tpu_custom_call.1} parent=63 // pred_fallthru
          _
        // Predicated region
        $region81: #{tpu_custom_call.1} parent=63 // pred_check
          %p489 = pneg %p183
        $region82: #{tpu_custom_call.1} parent=63 // pred_check_branch
          %491 = sbr.rel (%p489) target = $region84
        $region83: #{tpu_custom_call.1} parent=63 // pred_region
          %493 = dma.done [#allocation11], 256
        $region84: #{tpu_custom_call.1} parent=63 // pred_fallthru
          _
        // Predicated region
        $region85: #{tpu_custom_call.1} parent=63 // pred_check
          %p494 = pneg %p225
        $region86: #{tpu_custom_call.1} parent=63 // pred_check_branch
          %496 = sbr.rel (%p494) target = $region88
        $region87: #{tpu_custom_call.1} parent=63 // pred_region
          %498 = dma.done [#allocation14], 256
        $region88: #{tpu_custom_call.1} parent=63 // pred_fallthru
          _
        %s499 = sand.u32 %s55, 1
        %s500 = scalar_lea.sflag [#allocation5], %s499
        %s501 = sand.u32 %s55, 1
        %s502 = smul.addr %s501, 8
        %s503 = scalar_lea.vmem [#allocation4], %s502
        %p504 = pneg %p68
        %p505 = pneg %p65
        %s506 = sand.u32 %s33, 1
        %s507 = scalar_lea.sflag [#allocation8], %s506
        %s508 = sand.u32 %s81, 1
        %s509 = smul.addr %s508, 4
        %s510 = scalar_lea.vmem [#allocation7], %s509
        %p511 = pneg %p94
        %p512 = pneg %p91
        %s513 = sand.u32 %s33, 1
        %s514 = scalar_lea.sflag [#allocation8], %s513
        %s515 = sand.u32 %s107, 1
        %s516 = scalar_lea.vmem [#allocation9], %s515
        %p517 = pneg %p120
        %p518 = pneg %p117
        %p519 = pneg %p141
        %p520 = pneg %p138
        %p521 = pneg %p162
        %p522 = pneg %p159
        %p523 = pneg %p183
        %p524 = pneg %p180
        %p525 = pneg %p204
        %p526 = pneg %p201
        %p527 = pneg %p225
        %p528 = pneg %p222
        %p529 = pneg %p246
        %p530 = pneg %p243
        %p531 = pneg %p267
        %p532 = pneg %p264
        %p533 = pneg %p288
        %p534 = pneg %p285
        %p535 = pneg %p316
        %p536 = pneg %p313
        %s537 = sand.u32 %s303, 1
        %s538 = scalar_lea.sflag [#allocation6], %s537
        %s539 = sand.u32 %s303, 1
        %s540 = smul.addr %s539, 8
        %s541 = scalar_lea.vmem [#allocation15], %s540
        %p543 = scmp.eq.s32.totalorder %s38, 0
        // Predicated region
        $region89: #{tpu_custom_call.1} parent=63 // pred_check
          %p544 = pneg %p543
        $region90: #{tpu_custom_call.1} parent=63 // pred_check_branch
          %546 = sbr.rel (%p544) target = $region92
        $region91: #{tpu_custom_call.1} parent=63 // pred_region
          %v547 = vld [vmem:[%s469] sm:$0xf]
          %v548 = vld [vmem:[#allocation12] sm:$0xf]
          %v549 = vld [vmem:[#allocation12 + $0x4] sm:$0xf]
          %v550 = vld [vmem:[#allocation12 + $0x8] sm:$0xf]
          %v551 = vld [vmem:[#allocation12 + $0xc] sm:$0xf]
          %v552 = vld [vmem:[%s6] sm:$0x1]
          %v554 = vperm.slane %v552, 0
          %v560 = vunpack.c.l.b16 %v548
          %v561 = vunpack.c.l.b16 %v549
          %v562 = vunpack.c.l.b16 %v550
          %v563 = vunpack.c.l.b16 %v551
          %v564 = vpack.c.b16 %v561, %v560
          %v565 = vpack.c.b16 %v563, %v562
          %vm568 = vcmask 261120
          %v570 = vsel %vm568, %v547, 0
          %572 = vmatpush.bf16.msra.mxu0 0
          %573 = vmatpush.bf16.msra.mxu0 0
          %574 = vmatpush.bf16.msra.mxu0 0
          %575 = vmatpush.bf16.msra.mxu0 0
          %576 = vmatpush.bf16.msra.mxu0 0
          %577 = vmatpush.bf16.msra.mxu0 0
          %578 = vmatpush.bf16.msra.mxu0 %v565
          %579 = vmatpush.bf16.msra.mxu0 %v564
          %580 = vmatmul.bf16.gmra.mxu0 %v570
          %v581 = vpop.f32.mrf.mxu0
          %v582 = vadd.f32 %v554, %v581
          %v583 = vpop.f32.mrf.mxu0
          %584 = vdwg.mxu0
          %v585 = vpack.c.bf16 %v582, %v582
          %vm586 = vcmask 60416
          %587 = vst.msk [vmem:[#allocation2] sm:$0xf] %vm586, %v585
          %589 = vrot.lane.b32.xlu0 %v585, 96
          %v590 = vpop.permute.xlu0 %589
          %592 = vst.msk [vmem:[#allocation3] sm:$0xf] %vm586, %v590
          %593 = vrot.lane.b32.xlu0 %v585, 120
          %v594 = vpop.permute.xlu0 %593
          %s596 = scalar_lea.vmem [#allocation2], 4
          %597 = vst.msk [vmem:[%s596] sm:$0xf] %vm586, %v594
          %598 = vrot.lane.b32.xlu0 %v585, 88
          %v599 = vpop.permute.xlu0 %598
          %s601 = scalar_lea.vmem [#allocation3], 4
          %602 = vst.msk [vmem:[%s601] sm:$0xf] %vm586, %v599
          %603 = vrot.lane.b32.xlu0 %v585, 112
          %v604 = vpop.permute.xlu0 %603
          %s606 = scalar_lea.vmem [#allocation2], 8
          %607 = vst.msk [vmem:[%s606] sm:$0xf] %vm586, %v604
          %608 = vrot.lane.b32.xlu0 %v585, 80
          %v609 = vpop.permute.xlu0 %608
          %s611 = scalar_lea.vmem [#allocation3], 8
          %612 = vst.msk [vmem:[%s611] sm:$0xf] %vm586, %v609
          %613 = vrot.lane.b32.xlu0 %v585, 104
          %v614 = vpop.permute.xlu0 %613
          %s616 = scalar_lea.vmem [#allocation2], 12
          %617 = vst.msk [vmem:[%s616] sm:$0xf] %vm586, %v614
          %618 = vrot.lane.b32.xlu0 %v585, 72
          %v619 = vpop.permute.xlu0 %618
          %s621 = scalar_lea.vmem [#allocation3], 12
          %622 = vst.msk [vmem:[%s621] sm:$0xf] %vm586, %v619
        $region92: #{tpu_custom_call.1} parent=63 // pred_fallthru
          _
        %v623 = vld [vmem:[%s459] sm:$0xff]
        %v624 = vpack.c.bf16 %v623, %v623
        %v625 = vld [vmem:[#allocation10] sm:$0xf]
        %v626 = vld [vmem:[#allocation10 + $0x4] sm:$0xf]
        %v627 = vld [vmem:[#allocation10 + $0x8] sm:$0xf]
        %v628 = vld [vmem:[#allocation10 + $0xc] sm:$0xf]
        %v629 = vld [vmem:[%s4] sm:$0x1]
        %v631 = vperm.slane %v629, 0
        %v637 = vunpack.c.l.b16 %v625
        %v638 = vunpack.c.l.b16 %v626
        %v639 = vunpack.c.l.b16 %v627
        %v640 = vunpack.c.l.b16 %v628
        %v641 = vpack.c.b16 %v638, %v637
        %v642 = vpack.c.b16 %v640, %v639
        %vm645 = vcmask 261120
        %v647 = vsel %vm645, %v624, 0
        %649 = vmatpush.bf16.msra.mxu0 0
        %650 = vmatpush.bf16.msra.mxu0 0
        %651 = vmatpush.bf16.msra.mxu0 0
        %652 = vmatpush.bf16.msra.mxu0 0
        %653 = vmatpush.bf16.msra.mxu0 0
        %654 = vmatpush.bf16.msra.mxu0 0
        %655 = vmatpush.bf16.msra.mxu0 %v642
        %656 = vmatpush.bf16.msra.mxu0 %v641
        %657 = vmatmul.bf16.gmra.mxu0 %v647
        %v658 = vpop.f32.mrf.mxu0
        %v659 = vadd.f32 %v631, %v658
        %v660 = vpop.f32.mrf.mxu0
        %661 = vdwg.mxu0
        %663 = vrot.lane.b32.xlu0 %v659, 120
        %v664 = vpop.permute.xlu0 %663
        %666 = vrot.lane.b32.xlu0 %v659, 112
        %v667 = vpop.permute.xlu0 %666
        %669 = vrot.lane.b32.xlu0 %v659, 104
        %v670 = vpop.permute.xlu0 %669
        %v672 = vpack.c.bf16 %v659, %v659
        %v673 = vpack.c.bf16 %v664, %v664
        %v674 = vpack.c.bf16 %v667, %v667
        %v675 = vpack.c.bf16 %v670, %v670
        %v676 = vld [vmem:[#allocation2] sm:$0xf]
        %v677 = vld [vmem:[#allocation2 + $0x4] sm:$0xf]
        %v678 = vld [vmem:[#allocation2 + $0x8] sm:$0xf]
        %v679 = vld [vmem:[#allocation2 + $0xc] sm:$0xf]
        %v680 = vld [vmem:[#allocation3] sm:$0xf]
        %v681 = vld [vmem:[#allocation3 + $0x4] sm:$0xf]
        %v682 = vld [vmem:[#allocation3 + $0x8] sm:$0xf]
        %v683 = vld [vmem:[#allocation3 + $0xc] sm:$0xf]
        %vm684 = vcmask 64512
        %v686 = vsel %vm684, %v672, 0
        %v689 = vsel %vm684, %v676, 0
        %691 = vmatpush.bf16.xpose.msra.mxu0 0
        %692 = vmatpush.bf16.xpose.msra.mxu0 0
        %693 = vmatpush.bf16.xpose.msra.mxu0 0
        %694 = vmatpush.bf16.xpose.msra.mxu0 0
        %695 = vmatpush.bf16.xpose.msra.mxu0 0
        %696 = vmatpush.bf16.xpose.msra.mxu0 0
        %697 = vmatpush.bf16.xpose.msra.mxu0 0
        %698 = vmatpush.bf16.xpose.msra.mxu0 %v689
        %699 = vmatmul.bf16.gmra.mxu0 %v686
        %v700 = vpop.f32.mrf.mxu0
        %v701 = vadd.f32 0.0, %v700
        %v702 = vpop.f32.mrf.mxu0
        %703 = vdwg.mxu0
        %v705 = vsel %vm684, %v673, 0
        %v708 = vsel %vm684, %v677, 0
        %710 = vmatpush.bf16.xpose.msra.mxu0 0
        %711 = vmatpush.bf16.xpose.msra.mxu0 0
        %712 = vmatpush.bf16.xpose.msra.mxu0 0
        %713 = vmatpush.bf16.xpose.msra.mxu0 0
        %714 = vmatpush.bf16.xpose.msra.mxu0 0
        %715 = vmatpush.bf16.xpose.msra.mxu0 0
        %716 = vmatpush.bf16.xpose.msra.mxu0 0
        %717 = vmatpush.bf16.xpose.msra.mxu0 %v708
        %718 = vmatmul.bf16.gmra.mxu0 %v705
        %v719 = vpop.f32.mrf.mxu0
        %v720 = vadd.f32 0.0, %v719
        %v721 = vpop.f32.mrf.mxu0
        %722 = vdwg.mxu0
        %v724 = vsel %vm684, %v674, 0
        %v727 = vsel %vm684, %v678, 0
        %729 = vmatpush.bf16.xpose.msra.mxu0 0
        %730 = vmatpush.bf16.xpose.msra.mxu0 0
        %731 = vmatpush.bf16.xpose.msra.mxu0 0
        %732 = vmatpush.bf16.xpose.msra.mxu0 0
        %733 = vmatpush.bf16.xpose.msra.mxu0 0
        %734 = vmatpush.bf16.xpose.msra.mxu0 0
        %735 = vmatpush.bf16.xpose.msra.mxu0 0
        %736 = vmatpush.bf16.xpose.msra.mxu0 %v727
        %737 = vmatmul.bf16.gmra.mxu0 %v724
        %v738 = vpop.f32.mrf.mxu0
        %v739 = vadd.f32 0.0, %v738
        %v740 = vpop.f32.mrf.mxu0
        %741 = vdwg.mxu0
        %v743 = vsel %vm684, %v675, 0
        %v746 = vsel %vm684, %v679, 0
        %748 = vmatpush.bf16.xpose.msra.mxu0 0
        %749 = vmatpush.bf16.xpose.msra.mxu0 0
        %750 = vmatpush.bf16.xpose.msra.mxu0 0
        %751 = vmatpush.bf16.xpose.msra.mxu0 0
        %752 = vmatpush.bf16.xpose.msra.mxu0 0
        %753 = vmatpush.bf16.xpose.msra.mxu0 0
        %754 = vmatpush.bf16.xpose.msra.mxu0 0
        %755 = vmatpush.bf16.xpose.msra.mxu0 %v746
        %756 = vmatmul.bf16.gmra.mxu0 %v743
        %v757 = vpop.f32.mrf.mxu0
        %v758 = vadd.f32 0.0, %v757
        %v759 = vpop.f32.mrf.mxu0
        %760 = vdwg.mxu0
        %v761 = vmax.f32 %v701, -10000.0
        %v762 = vmax.f32 %v720, -10000.0
        %v763 = vmax.f32 %v739, -10000.0
        %v764 = vmax.f32 %v758, -10000.0
        %v765 = vmin.f32 %v761, 10000.0
        %v766 = vmin.f32 %v762, 10000.0
        %v767 = vmin.f32 %v763, 10000.0
        %v768 = vmin.f32 %v764, 10000.0
        %v769 = vld [vmem:[%s478] sm:$0x1]
        %v771 = vperm.slane %v769, 0
        %v773 = vadd.f32 %v765, %v771
        %v774 = vadd.f32 %v766, %v771
        %v775 = vadd.f32 %v767, %v771
        %v776 = vadd.f32 %v768, %v771
        %v777 = vsel %vm684, %v773, -inf
        %778 = vmax.xlane.f32.xlu0 %v777
        %v779 = vpop.xlane.xlu0 %778
        %v780 = vsel %vm684, %v774, -inf
        %781 = vmax.xlane.f32.xlu0 %v780
        %v782 = vpop.xlane.xlu0 %781
        %v783 = vsel %vm684, %v775, -inf
        %784 = vmax.xlane.f32.xlu0 %v783
        %v785 = vpop.xlane.xlu0 %784
        %v786 = vsel %vm684, %v776, -inf
        %787 = vmax.xlane.f32.xlu0 %v786
        %v788 = vpop.xlane.xlu0 %787
        %v789 = vsub.f32 %v773, %v779
        %v790 = vsub.f32 %v774, %v782
        %v791 = vsub.f32 %v775, %v785
        %v792 = vsub.f32 %v776, %v788
        %v793 = vmul.f32 %v789, 1.442695
        %v794 = vpow.pop %v793
        %v795 = vmul.f32 %v790, 1.442695
        %v796 = vpow.pop %v795
        %v797 = vmul.f32 %v791, 1.442695
        %v798 = vpow.pop %v797
        %v799 = vmul.f32 %v792, 1.442695
        %v800 = vpow.pop %v799
        %v801 = vsel %vm684, %v794, 0.0
        %802 = vadd.xlane.f32.xlu0 %v801
        %v803 = vpop.xlane.xlu0 %802
        %v804 = vsel %vm684, %v796, 0.0
        %805 = vadd.xlane.f32.xlu0 %v804
        %v806 = vpop.xlane.xlu0 %805
        %v807 = vsel %vm684, %v798, 0.0
        %808 = vadd.xlane.f32.xlu0 %v807
        %v809 = vpop.xlane.xlu0 %808
        %v810 = vsel %vm684, %v800, 0.0
        %811 = vadd.xlane.f32.xlu0 %v810
        %v812 = vpop.xlane.xlu0 %811
        %v813 = vpack.c.bf16 %v794, %v794
        %v814 = vpack.c.bf16 %v796, %v796
        %v815 = vpack.c.bf16 %v798, %v798
        %v816 = vpack.c.bf16 %v800, %v800
        %v818 = vsel %vm684, %v813, 0
        %vm820 = vcmask 1043456
        %v822 = vsel %vm820, %v680, 0
        %824 = vmatpush.bf16.msra.mxu0 0
        %825 = vmatpush.bf16.msra.mxu0 0
        %826 = vmatpush.bf16.msra.mxu0 0
        %827 = vmatpush.bf16.msra.mxu0 0
        %828 = vmatpush.bf16.msra.mxu0 0
        %829 = vmatpush.bf16.msra.mxu0 0
        %830 = vmatpush.bf16.msra.mxu0 0
        %831 = vmatpush.bf16.msra.mxu0 %v822
        %832 = vmatmul.bf16.gmra.mxu0 %v818
        %v833 = vpop.f32.mrf.mxu0
        %v834 = vadd.f32 0.0, %v833
        %v835 = vpop.f32.mrf.mxu0
        %836 = vdwg.mxu0
        %v838 = vsel %vm684, %v814, 0
        %v841 = vsel %vm820, %v681, 0
        %843 = vmatpush.bf16.msra.mxu0 0
        %844 = vmatpush.bf16.msra.mxu0 0
        %845 = vmatpush.bf16.msra.mxu0 0
        %846 = vmatpush.bf16.msra.mxu0 0
        %847 = vmatpush.bf16.msra.mxu0 0
        %848 = vmatpush.bf16.msra.mxu0 0
        %849 = vmatpush.bf16.msra.mxu0 0
        %850 = vmatpush.bf16.msra.mxu0 %v841
        %851 = vmatmul.bf16.gmra.mxu0 %v838
        %v852 = vpop.f32.mrf.mxu0
        %v853 = vadd.f32 0.0, %v852
        %v854 = vpop.f32.mrf.mxu0
        %855 = vdwg.mxu0
        %v857 = vsel %vm684, %v815, 0
        %v860 = vsel %vm820, %v682, 0
        %862 = vmatpush.bf16.msra.mxu0 0
        %863 = vmatpush.bf16.msra.mxu0 0
        %864 = vmatpush.bf16.msra.mxu0 0
        %865 = vmatpush.bf16.msra.mxu0 0
        %866 = vmatpush.bf16.msra.mxu0 0
        %867 = vmatpush.bf16.msra.mxu0 0
        %868 = vmatpush.bf16.msra.mxu0 0
        %869 = vmatpush.bf16.msra.mxu0 %v860
        %870 = vmatmul.bf16.gmra.mxu0 %v857
        %v871 = vpop.f32.mrf.mxu0
        %v872 = vadd.f32 0.0, %v871
        %v873 = vpop.f32.mrf.mxu0
        %874 = vdwg.mxu0
        %v876 = vsel %vm684, %v816, 0
        %v879 = vsel %vm820, %v683, 0
        %881 = vmatpush.bf16.msra.mxu0 0
        %882 = vmatpush.bf16.msra.mxu0 0
        %883 = vmatpush.bf16.msra.mxu0 0
        %884 = vmatpush.bf16.msra.mxu0 0
        %885 = vmatpush.bf16.msra.mxu0 0
        %886 = vmatpush.bf16.msra.mxu0 0
        %887 = vmatpush.bf16.msra.mxu0 0
        %888 = vmatpush.bf16.msra.mxu0 %v879
        %889 = vmatmul.bf16.gmra.mxu0 %v876
        %v890 = vpop.f32.mrf.mxu0
        %v891 = vadd.f32 0.0, %v890
        %v892 = vpop.f32.mrf.mxu0
        %893 = vdwg.mxu0
        %v894 = vrcp.pop %v803
        %v895 = vrcp.pop %v806
        %v896 = vrcp.pop %v809
        %v897 = vrcp.pop %v812
        %v898 = vmul.f32 %v834, %v894
        %v899 = vmul.f32 %v853, %v895
        %v900 = vmul.f32 %v872, %v896
        %v901 = vmul.f32 %v891, %v897
        %903 = vrot.lane.b32.xlu0 %v899, 8
        %v904 = vpop.permute.xlu0 %903
        %907 = vrot.lane.b32.xlu0 %v900, 16
        %v908 = vpop.permute.xlu0 %907
        %911 = vrot.lane.b32.xlu0 %v901, 24
        %v912 = vpop.permute.xlu0 %911
        %v914 = vsel %vm684, %v898, %v904
        %vm915 = vcmask 130048
        %v916 = vsel %vm915, %v914, %v908
        %vm917 = vcmask 195584
        %v918 = vsel %vm917, %v916, %v912
        %v919 = vpack.c.bf16 %v918, %v918
        %v920 = vld [vmem:[#allocation13] sm:$0xf]
        %v921 = vld [vmem:[#allocation13 + $0x4] sm:$0xf]
        %v922 = vld [vmem:[#allocation13 + $0x8] sm:$0xf]
        %v923 = vld [vmem:[#allocation13 + $0xc] sm:$0xf]
        %v924 = vld [vmem:[%s8] sm:$0x1]
        %v926 = vperm.slane %v924, 0
        %v932 = vunpack.c.l.b16 %v920
        %v933 = vunpack.c.l.b16 %v921
        %v934 = vunpack.c.l.b16 %v922
        %v935 = vunpack.c.l.b16 %v923
        %v936 = vpack.c.b16 %v933, %v932
        %v937 = vpack.c.b16 %v935, %v934
        %v941 = vsel %vm645, %v919, 0
        %943 = vmatpush.bf16.msra.mxu0 0
        %944 = vmatpush.bf16.msra.mxu0 0
        %945 = vmatpush.bf16.msra.mxu0 0
        %946 = vmatpush.bf16.msra.mxu0 0
        %947 = vmatpush.bf16.msra.mxu0 0
        %948 = vmatpush.bf16.msra.mxu0 0
        %949 = vmatpush.bf16.msra.mxu0 %v937
        %950 = vmatpush.bf16.msra.mxu0 %v936
        %951 = vmatmul.bf16.gmra.mxu0 %v941
        %v952 = vpop.f32.mrf.mxu0
        %v953 = vadd.f32 %v926, %v952
        %v954 = vpop.f32.mrf.mxu0
        %955 = vdwg.mxu0
        %v956 = vadd.f32 %v953, %v623
        %v957 = vsel %vm645, %v956, 0.0
        %958 = vadd.xlane.f32.xlu0 %v957
        %v959 = vpop.xlane.xlu0 %958
        %v960 = vrcp.pop 32.0
        %v961 = vmul.f32 32.0, %v960
        %v962 = vsub.f32 1.0, %v961
        %v963 = vmul.f32 %v960, %v962
        %v964 = vadd.f32 %v960, %v963
        %vm965 = vweird.f32 %v960
        %v966 = vsel %vm965, %v960, %v964
        %v967 = vmul.f32 %v959, %v966
        %v968 = vsub.f32 %v956, %v967
        %v969 = vmul.f32 %v968, %v968
        %v970 = vsel %vm645, %v969, 0.0
        %971 = vadd.xlane.f32.xlu0 %v970
        %v972 = vpop.xlane.xlu0 %971
        %v973 = vmul.f32 %v972, %v966
        %v974 = vld [vmem:[%s9] sm:$0x1]
        %v975 = vadd.f32 %v973, 1e-12
        %v976 = vrsqrt.pop %v975
        %v977 = vmul.f32 %v976, %v975
        %v978 = vmul.f32 %v977, %v976
        %v979 = vmul.f32 0.5, %v978
        %v980 = vsub.f32 1.5, %v979
        %v981 = vmul.f32 %v976, %v980
        %vm982 = vweird.f32 %v975
        %vm983 = vweird.f32 %v976
        %vm984 = vmor %vm982, %vm983
        %v985 = vsel %vm984, %v976, %v981
        %v986 = vmul.f32 %v968, %v985
        %v988 = vperm.slane %v974, 0
        %v990 = vmul.f32 %v988, %v986
        %v991 = vld [vmem:[%s10] sm:$0x1]
        %v993 = vperm.slane %v991, 0
        %v995 = vadd.f32 %v990, %v993
        %996 = vst.msk [vmem:[%s541] sm:$0xff] %vm645, %v995
        %s997 = sand.u32 %s303, 1
        %s998 = scalar_lea.sflag [#allocation6], %s997
        %s999 = sand.u32 %s303, 1
        %s1000 = smul.addr %s999, 8
        %s1001 = scalar_lea.vmem [#allocation15], %s1000
        // Predicated region
        $region93: #{tpu_custom_call.1} parent=63 // pred_check
          %p1002 = pneg %p313
        $region94: #{tpu_custom_call.1} parent=63 // pred_check_branch
          %1004 = sbr.rel (%p1002) target = $region96
        $region95: #{tpu_custom_call.1} parent=63 // pred_region
          %1006 = vsyncadd %s998, 0
          %s1007 = sadd.s32 %s38, %s37
          %s1008 = smul.addr %s1007, 8
          %s1009 = scalar_lea.hbm %s11, %s1008
          %s1011 = sshll.u32 %s1001, 4
          %s1012 = int_to_ptr.vmem [resolvable:$true] %s1011
          %s1013 = sshll.u32 %s1009, 4
          %s1014 = int_to_ptr.hbm [resolvable:$true] %s1013
          %1016 = dma.vmem_to_hbm [thread:$0]  %s1012, 128, %s1014, %s998
        $region96: #{tpu_custom_call.1} parent=63 // pred_fallthru
          _
      $region64: #{tpu_custom_call.1} parent=5 // pred_fallthru
        _
      %p1017 = scmp.le.s32.totalorder 2, %s28
      // Predicated region
      $region97: #{tpu_custom_call.1} parent=5 // pred_check
        %p1018 = pneg %p1017
      $region98: #{tpu_custom_call.1} parent=5 // pred_check_branch
        %1020 = sbr.rel (%p1018) target = $region100
      $region99: #{tpu_custom_call.1} parent=5 // pred_region
        %s1021 = ssub.s32 %s28, 2
        // Predicated region
        $region101: #{tpu_custom_call.1} parent=99 // pred_check
          %p1022 = pneg %p319
        $region102: #{tpu_custom_call.1} parent=99 // pred_check_branch
          %1024 = sbr.rel (%p1022) target = $region104
        $region103: #{tpu_custom_call.1} parent=99 // pred_region
          %s1025 = sand.u32 %s304, 1
          %s1026 = scalar_lea.sflag [#allocation6], %s1025
          %s1027 = sand.u32 %s304, 1
          %s1028 = smul.addr %s1027, 8
          %s1029 = scalar_lea.vmem [#allocation15], %s1028
          %1031 = dma.done %s1026, 128
        $region104: #{tpu_custom_call.1} parent=99 // pred_fallthru
          _
      $region100: #{tpu_custom_call.1} parent=5 // pred_fallthru
        _
    $region6: #{tpu_custom_call.1} parent=1 // loop_footer
      %s32 = sadd.s32 1, %s28
    $region7: #{tpu_custom_call.1} parent=1 // loop_footer_branch
      %27 = sbr.rel target = $region3
    $region8: #{tpu_custom_call.1} parent=1 // loop_exit
      _
    %1032 = vsyncpa [#allocation5], 1
    %s1033 = scalar_lea.sflag [#allocation5], 1
    %1034 = vsyncpa %s1033, 1
    %1035 = vsyncpa [#allocation8], 1
    %s1036 = scalar_lea.sflag [#allocation8], 1
    %1037 = vsyncpa %s1036, 1
    %1038 = vsyncpa [#allocation11], 1
    %1039 = vsyncpa [#allocation14], 1
    %1040 = vsyncpa [#allocation6], 1
    %s1041 = scalar_lea.sflag [#allocation6], 1
    %1042 = vsyncpa %s1041, 1

</llo_original>
